<compile_context>
chip_gen: v6e
topology: v6e:2x2x1
jax: 0.10.0
libtpu: 0.0.40
codegen_flags: <defaults>
</compile_context>

<pallas_src>
import functools

import jax
import jax.numpy as jnp
from jax.experimental import pallas as pl
from jax.experimental.pallas import tpu as pltpu


# ---------------------------------------------------------------------------
# Kernel
# ---------------------------------------------------------------------------
def _cnp_kernel(ctx_ref, tgt_ref,
                w1_ref, b1_ref, w2_ref, b2_ref, w3_ref, b3_ref, w4_ref, b4_ref,
                v1r_ref, v1t_ref, c1_ref, v2_ref, c2_ref, v3_ref, c3_ref,
                out_ref, *, n_ctx, n_tgt):
    f32 = jnp.float32
    e_pad = w4_ref.shape[-1]            # padded encoder width (multiple of 128)
    d_pad = v1t_ref.shape[-1]           # padded decoder width (multiple of 128)
    block_b = ctx_ref.shape[0] // n_ctx

    def dense(x, w_ref, b_ref=None, relu=False):
        w = w_ref[...]
        y = jnp.dot(x.astype(w.dtype), w, preferred_element_type=f32)
        if b_ref is not None:
            y = y + b_ref[...]          # biases stay f32 (post-accumulation)
        if relu:
            y = jnp.maximum(y, 0.0)
        return y

    # ----- DeterministicEncoder: shared-weight 4-layer MLP over all
    # (batch*ctx) rows -> one big-M matmul per layer.
    ctx = ctx_ref[...]                                   # (block_b*Nc, Dc)
    h = dense(ctx, w1_ref, b1_ref, relu=True)
    h = dense(h, w2_ref, b2_ref, relu=True)
    h = dense(h, w3_ref, b3_ref, relu=True)
    r = dense(h, w4_ref, b4_ref)                         # (block_b*Nc, Ep)
    # Single reshape (layout no-op: n_ctx % 8 == 0, e_pad % 128 == 0); XLU
    # cross-sublane sum + scalar scale instead of mean.
    r_c = jnp.sum(r.reshape(block_b, n_ctx, e_pad), axis=1) * f32(1.0 / n_ctx)

    # ----- Decoder: concat(r_c_bcast, tgt) @ V1 == tgt @ V1t + (r_c @ V1r),
    # with the r_c contribution computed once per batch row and broadcast.
    tgt = tgt_ref[...]                                   # (block_b*Nt, Dt)
    r_bias = dense(r_c, v1r_ref, c1_ref)                 # (block_b, Dp)
    d = dense(tgt, v1t_ref)                              # (block_b*Nt, Dp)
    d = d.reshape(block_b, n_tgt, d_pad) + r_bias[:, None, :]
    d = jnp.maximum(d, 0.0).reshape(block_b * n_tgt, d_pad)   # layout no-op
    d = dense(d, v2_ref, c2_ref, relu=True)
    out = dense(d, v3_ref, c3_ref)                       # (block_b*Nt, Op)

    # Lane-dense (Op = multiple of 128) packed (mu | log_sigma | zero-pad)
    # slab; the split / 0.1+0.9*softplus / column slice happen in the wrapper.
    out_ref[...] = out.astype(out_ref.dtype)


# ---------------------------------------------------------------------------
# Wrapper helpers
# ---------------------------------------------------------------------------
def _round_up(n, m):
    return ((n + m - 1) // m) * m


def _pad2d(a, rows, cols):
    r, c = a.shape
    return jnp.pad(a, ((0, rows - r), (0, cols - c)))


def _vmem_policy():
    """(working-set budget, vmem_limit_bytes, prefer >=2 even grid steps)."""
    kind = ""
    try:
        kind = jax.devices()[0].device_kind.lower()
    except Exception:
        pass
    if "v7" in kind:
        # 64 MiB VMEM per TC, 2 TCs per chip: small budget, keep both TCs busy.
        return 40 << 20, 56 << 20, True
    if "v5" in kind or "v6" in kind:
        # 128 MiB VMEM, single TC: maximise block_b, minimise grid steps.
        return 80 << 20, 100 << 20, False
    # Unknown generation: conservative (safe on v7x too).
    return 40 << 20, 56 << 20, True


def _pick_block_b(B, bytes_per_batch, fixed_bytes, vmem_budget, prefer_multi_step):
    """Largest divisor of B whose working set fits the VMEM budget.

    On 2-TC chips (v7x) prefer an even number of grid steps >= 2 so both
    TensorCores get work; on single-TC chips just take the largest block.
    """
    divisors = [d for d in range(1, B + 1) if B % d == 0]
    fitting = [d for d in divisors
               if fixed_bytes + d * bytes_per_batch <= vmem_budget]
    if not fitting:
        return 1
    if prefer_multi_step and B >= 2:
        even = [d for d in fitting if (B // d) >= 2 and (B // d) % 2 == 0]
        multi = [d for d in fitting if (B // d) >= 2]
        if even:
            return even[-1]
        if multi:
            return multi[-1]
    return fitting[-1]


# ---------------------------------------------------------------------------
# Forward
# ---------------------------------------------------------------------------
def cnp_forward(params, ctx_x, ctx_y, tgt_x, *, block_b=None,
                use_bf16_matmul=False):
    """Returns (mu, sigma), each of shape (B, N_tgt, output_dim).

    # TODO(synk): torch.distributions.Independent(Normal(mu, sigma), 1) has no
    # Pallas equivalent; the distribution parameters (mu, sigma) are returned.
    """
    B, Nc, Dx = ctx_x.shape
    _, _, Dy = ctx_y.shape
    _, Nt, Dt = tgt_x.shape
    output_dim = params["c3"].shape[-1] // 2
    Dc = Dx + Dy

    assert Nc % 8 == 0 and Nt % 8 == 0, (
        "N_ctx and N_tgt must be multiples of 8 so in-kernel reshapes are "
        "layout no-ops")

    enc_dim = params["w4"].shape[-1]
    dec_dim = params["v2"].shape[-1]
    e_pad = _round_up(enc_dim, 128)
    d_pad = _round_up(dec_dim, 128)
    o_pad = _round_up(2 * output_dim, 128)

    compute_dtype = jnp.bfloat16 if use_bf16_matmul else jnp.float32

    # Streamed operands: pre-flattened (batch*points, feat) in the matmul
    # dtype (bf16 streaming halves DMA bytes when use_bf16_matmul=True).
    ctx = (jnp.concatenate([ctx_x, ctx_y], axis=-1)
           .reshape(B * Nc, Dc).astype(compute_dtype))
    tgt = jnp.asarray(tgt_x).reshape(B * Nt, Dt).astype(compute_dtype)

    # Zero-pad hidden / output widths to multiples of 128 lanes (exact through
    # the ReLU/linear stack; padded columns stay identically zero).
    p = params
    mats = {
        "w1": _pad2d(p["w1"], Dc, e_pad),
        "w2": _pad2d(p["w2"], e_pad, e_pad),
        "w3": _pad2d(p["w3"], e_pad, e_pad),
        "w4": _pad2d(p["w4"], e_pad, e_pad),
        "v1r": _pad2d(p["v1r"], e_pad, d_pad),
        "v1t": _pad2d(p["v1t"], Dt, d_pad),
        "v2": _pad2d(p["v2"], d_pad, d_pad),
        "v3": _pad2d(p["v3"], d_pad, o_pad),
    }
    biases = {
        "b1": _pad2d(p["b1"], 1, e_pad),
        "b2": _pad2d(p["b2"], 1, e_pad),
        "b3": _pad2d(p["b3"], 1, e_pad),
        "b4": _pad2d(p["b4"], 1, e_pad),
        "c1": _pad2d(p["c1"], 1, d_pad),
        "c2": _pad2d(p["c2"], 1, d_pad),
        "c3": _pad2d(p["c3"], 1, o_pad),
    }
    order = ("w1", "b1", "w2", "b2", "w3", "b3", "w4", "b4",
             "v1r", "v1t", "c1", "v2", "c2", "v3", "c3")
    weights = [mats[n].astype(compute_dtype) if n in mats
               else biases[n].astype(jnp.float32)          # biases stay f32
               for n in order]

    # ----- generation-aware block_b / VMEM policy ---------------------------
    vmem_budget, vmem_limit, prefer_multi_step = _vmem_policy()
    elem = 2 if use_bf16_matmul else 4
    bytes_per_batch = (2 * (Nc * Dc + Nt * Dt) * elem          # streamed data (2x buf)
                       + 2 * Nt * o_pad * 4                    # output (2x buf)
                       + 3 * max(Nc * e_pad, Nt * d_pad) * 4)  # live f32 activations
    weight_bytes = 2 * sum(int(w.size) * w.dtype.itemsize for w in weights)
    if block_b is None:
        block_b = _pick_block_b(B, bytes_per_batch, weight_bytes,
                                vmem_budget, prefer_multi_step)
    assert B % block_b == 0, "block_b must divide the batch size"
    grid = (B // block_b,)

    # TODO(synk): for very large N_tgt / N_ctx add a trailing "arbitrary" grid
    # axis that tiles the target points (encoder + r_c computed once per batch
    # block under pl.when(t == 0) into VMEM scratch); not needed at these sizes.
    data_specs = [
        pl.BlockSpec((block_b * Nc, Dc), lambda b: (b, 0)),
        pl.BlockSpec((block_b * Nt, Dt), lambda b: (b, 0)),
    ]
    # Grid-invariant weights: constant index_map means they are not re-DMA'd
    # across steps; default buffering is fine at these (padded, small) sizes.
    weight_specs = [pl.BlockSpec(w.shape, lambda b: (0, 0)) for w in weights]
    out_spec = pl.BlockSpec((block_b * Nt, o_pad), lambda b: (b, 0))
    out_shape = jax.ShapeDtypeStruct((B * Nt, o_pad), jnp.float32)

    kernel = functools.partial(_cnp_kernel, n_ctx=Nc, n_tgt=Nt)
    packed = pl.pallas_call(
        kernel,
        grid=grid,
        in_specs=data_specs + weight_specs,
        out_specs=out_spec,
        out_shape=out_shape,
        compiler_params=pltpu.CompilerParams(
            dimension_semantics=("parallel",),
            vmem_limit_bytes=vmem_limit),
    )(ctx, tgt, *weights)

    packed = packed.reshape(B, Nt, o_pad)
    mu = packed[..., :output_dim]
    sigma = 0.1 + 0.9 * jax.nn.softplus(packed[..., output_dim:2 * output_dim])
    return mu, sigma


# ---------------------------------------------------------------------------
# Parameter init (mirrors torch.nn.Linear's U(-1/sqrt(fan_in), +1/sqrt(fan_in)))
# ---------------------------------------------------------------------------
def _init_linear(key, fan_in, fan_out):
    kw, kb = jax.random.split(key)
    bound = 1.0 / (fan_in ** 0.5)
    W = jax.random.uniform(kw, (fan_in, fan_out), jnp.float32, -bound, bound)
    b = jax.random.uniform(kb, (1, fan_out), jnp.float32, -bound, bound)
    return W, b


def init_cnp_params(key, *, x_dim, y_dim, tgt_dim, output_dim,
                    encoder_dim, decoder_dim):
    keys = jax.random.split(key, 7)
    enc_in = x_dim + y_dim

    # Encoder: 4 linear layers (encoder_layers=4), width = output = encoder_dim
    W1, b1 = _init_linear(keys[0], enc_in, encoder_dim)
    W2, b2 = _init_linear(keys[1], encoder_dim, encoder_dim)
    W3, b3 = _init_linear(keys[2], encoder_dim, encoder_dim)
    W4, b4 = _init_linear(keys[3], encoder_dim, encoder_dim)

    # Decoder: 3 linear layers (decoder_layers=3), width=decoder_dim, out=2*od
    V1, c1 = _init_linear(keys[4], encoder_dim + tgt_dim, decoder_dim)
    V2, c2 = _init_linear(keys[5], decoder_dim, decoder_dim)
    V3, c3 = _init_linear(keys[6], decoder_dim, 2 * output_dim)

    return {
        "w1": W1, "b1": b1, "w2": W2, "b2": b2, "w3": W3, "b3": b3,
        "w4": W4, "b4": b4,
        "v1r": V1[:encoder_dim], "v1t": V1[encoder_dim:], "c1": c1,
        "v2": V2, "c2": c2, "v3": V3, "c3": c3,
    }


# ---------------------------------------------------------------------------
# Pure-JAX reference of the torch forward pass (for the correctness check)
# ---------------------------------------------------------------------------
def _cnp_forward_ref(params, ctx_x, ctx_y, tgt_x):
    p = params
    ctx = jnp.concatenate([ctx_x, ctx_y], axis=-1)
    h = jax.nn.relu(ctx @ p["w1"] + p["b1"])
    h = jax.nn.relu(h @ p["w2"] + p["b2"])
    h = jax.nn.relu(h @ p["w3"] + p["b3"])
    r = h @ p["w4"] + p["b4"]
    r_c = jnp.mean(r, axis=1)                                   # (B, enc_dim)

    Nt = tgt_x.shape[1]
    ctt = jnp.concatenate(
        [jnp.broadcast_to(r_c[:, None, :], (r_c.shape[0], Nt, r_c.shape[-1])),
         tgt_x], axis=-1)
    V1 = jnp.concatenate([p["v1r"], p["v1t"]], axis=0)
    d = jax.nn.relu(ctt @ V1 + p["c1"])
    d = jax.nn.relu(d @ p["v2"] + p["c2"])
    out = d @ p["v3"] + p["c3"]
    odim = p["c3"].shape[-1] // 2
    mu, log_sigma = out[..., :odim], out[..., odim:]
    sigma = 0.1 + 0.9 * jax.nn.softplus(log_sigma)
    return mu, sigma


if __name__ == "__main__":
    # Small shapes consistent with the module's contract:
    # ctx_x/ctx_y: (B, N_ctx, 1), tgt_x: (B, N_tgt, 1)
    B, N_CTX, N_TGT = 2, 8, 8
    X_DIM = Y_DIM = 1
    OUTPUT_DIM = 1
    ENC_DIM = DEC_DIM = 32            # padded to 128 lanes inside the wrapper

    key = jax.random.PRNGKey(0)
    k_params, k_cx, k_cy, k_tx = jax.random.split(key, 4)

    params = init_cnp_params(
        k_params, x_dim=X_DIM, y_dim=Y_DIM, tgt_dim=X_DIM,
        output_dim=OUTPUT_DIM, encoder_dim=ENC_DIM, decoder_dim=DEC_DIM)

    ctx_x = jax.random.normal(k_cx, (B, N_CTX, X_DIM), jnp.float32)
    ctx_y = jax.random.normal(k_cy, (B, N_CTX, Y_DIM), jnp.float32)
    tgt_x = jax.random.normal(k_tx, (B, N_TGT, X_DIM), jnp.float32)

    mu, sigma = cnp_forward(params, ctx_x, ctx_y, tgt_x)
    jax.block_until_ready((mu, sigma))

    mu_ref, sigma_ref = _cnp_forward_ref(params, ctx_x, ctx_y, tgt_x)
    assert mu.shape == (B, N_TGT, OUTPUT_DIM)
    assert sigma.shape == (B, N_TGT, OUTPUT_DIM)
    assert jnp.allclose(mu, mu_ref, atol=5e-5, rtol=5e-5)
    assert jnp.allclose(sigma, sigma_ref, atol=5e-5, rtol=5e-5)
    assert bool(jnp.all(sigma > 0.1))

    print("KERNEL_OK")
</pallas_src>

<mosaic_0001>
module attributes {stable_mosaic.version = 11 : i64} {
  func.func @_cnp_kernel(%arg0: i32, %arg1: memref<8x2xf32, #tpu.memory_space<vmem>>, %arg2: memref<8x1xf32, #tpu.memory_space<vmem>>, %arg3: memref<2x128xf32, #tpu.memory_space<vmem>>, %arg4: memref<1x128xf32, #tpu.memory_space<vmem>>, %arg5: memref<128x128xf32, #tpu.memory_space<vmem>>, %arg6: memref<1x128xf32, #tpu.memory_space<vmem>>, %arg7: memref<128x128xf32, #tpu.memory_space<vmem>>, %arg8: memref<1x128xf32, #tpu.memory_space<vmem>>, %arg9: memref<128x128xf32, #tpu.memory_space<vmem>>, %arg10: memref<1x128xf32, #tpu.memory_space<vmem>>, %arg11: memref<128x128xf32, #tpu.memory_space<vmem>>, %arg12: memref<1x128xf32, #tpu.memory_space<vmem>>, %arg13: memref<1x128xf32, #tpu.memory_space<vmem>>, %arg14: memref<128x128xf32, #tpu.memory_space<vmem>>, %arg15: memref<1x128xf32, #tpu.memory_space<vmem>>, %arg16: memref<128x128xf32, #tpu.memory_space<vmem>>, %arg17: memref<1x128xf32, #tpu.memory_space<vmem>>, %arg18: memref<8x128xf32, #tpu.memory_space<vmem>>) attributes {dimension_semantics = [#tpu.dimension_semantics<parallel>], iteration_bounds = array<i64: 2>, scalar_prefetch = 0 : i64, scratch_operands = 0 : i64, tpu.core_type = #tpu.core_type<tc>, window_params = [{transform_indices = @transform_0, window_bounds = array<i64: 8, 2>}, {transform_indices = @transform_1, window_bounds = array<i64: 8, 1>}, {pipeline_mode = #tpu.pipeline_mode<synchronous>, transform_indices = @transform_2, window_bounds = array<i64: 2, 128>}, {pipeline_mode = #tpu.pipeline_mode<synchronous>, transform_indices = @transform_3, window_bounds = array<i64: 1, 128>}, {pipeline_mode = #tpu.pipeline_mode<synchronous>, transform_indices = @transform_4, window_bounds = array<i64: 128, 128>}, {pipeline_mode = #tpu.pipeline_mode<synchronous>, transform_indices = @transform_5, window_bounds = array<i64: 1, 128>}, {pipeline_mode = #tpu.pipeline_mode<synchronous>, transform_indices = @transform_6, window_bounds = array<i64: 128, 128>}, {pipeline_mode = #tpu.pipeline_mode<synchronous>, transform_indices = @transform_7, window_bounds = array<i64: 1, 128>}, {pipeline_mode = #tpu.pipeline_mode<synchronous>, transform_indices = @transform_8, window_bounds = array<i64: 128, 128>}, {pipeline_mode = #tpu.pipeline_mode<synchronous>, transform_indices = @transform_9, window_bounds = array<i64: 1, 128>}, {pipeline_mode = #tpu.pipeline_mode<synchronous>, transform_indices = @transform_10, window_bounds = array<i64: 128, 128>}, {pipeline_mode = #tpu.pipeline_mode<synchronous>, transform_indices = @transform_11, window_bounds = array<i64: 1, 128>}, {pipeline_mode = #tpu.pipeline_mode<synchronous>, transform_indices = @transform_12, window_bounds = array<i64: 1, 128>}, {pipeline_mode = #tpu.pipeline_mode<synchronous>, transform_indices = @transform_13, window_bounds = array<i64: 128, 128>}, {pipeline_mode = #tpu.pipeline_mode<synchronous>, transform_indices = @transform_14, window_bounds = array<i64: 1, 128>}, {pipeline_mode = #tpu.pipeline_mode<synchronous>, transform_indices = @transform_15, window_bounds = array<i64: 128, 128>}, {pipeline_mode = #tpu.pipeline_mode<synchronous>, transform_indices = @transform_16, window_bounds = array<i64: 1, 128>}, {transform_indices = @transform_17, window_bounds = array<i64: 8, 128>}]} {
    %c0 = arith.constant 0 : index
    %c0_0 = arith.constant 0 : index
    %0 = vector.load %arg1[%c0, %c0_0] : memref<8x2xf32, #tpu.memory_space<vmem>>, vector<8x2xf32>
    %c0_1 = arith.constant 0 : index
    %c0_2 = arith.constant 0 : index
    %1 = vector.load %arg3[%c0_1, %c0_2] : memref<2x128xf32, #tpu.memory_space<vmem>>, vector<2x128xf32>
    %cst = arith.constant dense<0.000000e+00> : vector<8x128xf32>
    %2 = tpu.matmul %0, %1, %cst {dimension_numbers = #tpu.dot_dimension_numbers<[1], [0], [0], [1], [0, 0, 1, 1], [], []>} : vector<8x2xf32>, vector<2x128xf32>, vector<8x128xf32> -> vector<8x128xf32>
    %c0_3 = arith.constant 0 : index
    %c0_4 = arith.constant 0 : index
    %3 = vector.load %arg4[%c0_3, %c0_4] : memref<1x128xf32, #tpu.memory_space<vmem>>, vector<1x128xf32>
    %4 = vector.broadcast %3 : vector<1x128xf32> to vector<8x128xf32>
    %5 = arith.addf %2, %4 : vector<8x128xf32>
    %cst_5 = arith.constant 0.000000e+00 : f32
    %6 = vector.broadcast %cst_5 : f32 to vector<8x128xf32>
    %7 = arith.maximumf %5, %6 : vector<8x128xf32>
    %c0_6 = arith.constant 0 : index
    %c0_7 = arith.constant 0 : index
    %8 = vector.load %arg5[%c0_6, %c0_7] : memref<128x128xf32, #tpu.memory_space<vmem>>, vector<128x128xf32>
    %cst_8 = arith.constant dense<0.000000e+00> : vector<8x128xf32>
    %9 = tpu.matmul %7, %8, %cst_8 {dimension_numbers = #tpu.dot_dimension_numbers<[1], [0], [0], [1], [0, 0, 1, 1], [], []>} : vector<8x128xf32>, vector<128x128xf32>, vector<8x128xf32> -> vector<8x128xf32>
    %c0_9 = arith.constant 0 : index
    %c0_10 = arith.constant 0 : index
    %10 = vector.load %arg6[%c0_9, %c0_10] : memref<1x128xf32, #tpu.memory_space<vmem>>, vector<1x128xf32>
    %11 = vector.broadcast %10 : vector<1x128xf32> to vector<8x128xf32>
    %12 = arith.addf %9, %11 : vector<8x128xf32>
    %cst_11 = arith.constant 0.000000e+00 : f32
    %13 = vector.broadcast %cst_11 : f32 to vector<8x128xf32>
    %14 = arith.maximumf %12, %13 : vector<8x128xf32>
    %c0_12 = arith.constant 0 : index
    %c0_13 = arith.constant 0 : index
    %15 = vector.load %arg7[%c0_12, %c0_13] : memref<128x128xf32, #tpu.memory_space<vmem>>, vector<128x128xf32>
    %cst_14 = arith.constant dense<0.000000e+00> : vector<8x128xf32>
    %16 = tpu.matmul %14, %15, %cst_14 {dimension_numbers = #tpu.dot_dimension_numbers<[1], [0], [0], [1], [0, 0, 1, 1], [], []>} : vector<8x128xf32>, vector<128x128xf32>, vector<8x128xf32> -> vector<8x128xf32>
    %c0_15 = arith.constant 0 : index
    %c0_16 = arith.constant 0 : index
    %17 = vector.load %arg8[%c0_15, %c0_16] : memref<1x128xf32, #tpu.memory_space<vmem>>, vector<1x128xf32>
    %18 = vector.broadcast %17 : vector<1x128xf32> to vector<8x128xf32>
    %19 = arith.addf %16, %18 : vector<8x128xf32>
    %cst_17 = arith.constant 0.000000e+00 : f32
    %20 = vector.broadcast %cst_17 : f32 to vector<8x128xf32>
    %21 = arith.maximumf %19, %20 : vector<8x128xf32>
    %c0_18 = arith.constant 0 : index
    %c0_19 = arith.constant 0 : index
    %22 = vector.load %arg9[%c0_18, %c0_19] : memref<128x128xf32, #tpu.memory_space<vmem>>, vector<128x128xf32>
    %cst_20 = arith.constant dense<0.000000e+00> : vector<8x128xf32>
    %23 = tpu.matmul %21, %22, %cst_20 {dimension_numbers = #tpu.dot_dimension_numbers<[1], [0], [0], [1], [0, 0, 1, 1], [], []>} : vector<8x128xf32>, vector<128x128xf32>, vector<8x128xf32> -> vector<8x128xf32>
    %c0_21 = arith.constant 0 : index
    %c0_22 = arith.constant 0 : index
    %24 = vector.load %arg10[%c0_21, %c0_22] : memref<1x128xf32, #tpu.memory_space<vmem>>, vector<1x128xf32>
    %25 = vector.broadcast %24 : vector<1x128xf32> to vector<8x128xf32>
    %26 = arith.addf %23, %25 : vector<8x128xf32>
    %27 = vector.shape_cast %26 : vector<8x128xf32> to vector<1x8x128xf32>
    %cst_23 = arith.constant dense<0.000000e+00> : vector<1x128xf32>
    %28 = vector.multi_reduction <add>, %27, %cst_23 [1] : vector<1x8x128xf32> to vector<1x128xf32>
    %cst_24 = arith.constant 1.250000e-01 : f32
    %29 = vector.broadcast %cst_24 : f32 to vector<1x128xf32>
    %30 = arith.mulf %28, %29 : vector<1x128xf32>
    %c0_25 = arith.constant 0 : index
    %c0_26 = arith.constant 0 : index
    %31 = vector.load %arg2[%c0_25, %c0_26] : memref<8x1xf32, #tpu.memory_space<vmem>>, vector<8x1xf32>
    %c0_27 = arith.constant 0 : index
    %c0_28 = arith.constant 0 : index
    %32 = vector.load %arg11[%c0_27, %c0_28] : memref<128x128xf32, #tpu.memory_space<vmem>>, vector<128x128xf32>
    %cst_29 = arith.constant dense<0.000000e+00> : vector<1x128xf32>
    %33 = tpu.matmul %30, %32, %cst_29 {dimension_numbers = #tpu.dot_dimension_numbers<[1], [0], [0], [1], [0, 0, 1, 1], [], []>} : vector<1x128xf32>, vector<128x128xf32>, vector<1x128xf32> -> vector<1x128xf32>
    %c0_30 = arith.constant 0 : index
    %c0_31 = arith.constant 0 : index
    %34 = vector.load %arg13[%c0_30, %c0_31] : memref<1x128xf32, #tpu.memory_space<vmem>>, vector<1x128xf32>
    %35 = arith.addf %33, %34 : vector<1x128xf32>
    %c0_32 = arith.constant 0 : index
    %c0_33 = arith.constant 0 : index
    %36 = vector.load %arg12[%c0_32, %c0_33] : memref<1x128xf32, #tpu.memory_space<vmem>>, vector<1x128xf32>
    %cst_34 = arith.constant dense<0.000000e+00> : vector<8x128xf32>
    %37 = tpu.matmul %31, %36, %cst_34 {dimension_numbers = #tpu.dot_dimension_numbers<[1], [0], [0], [1], [0, 0, 1, 1], [], []>} : vector<8x1xf32>, vector<1x128xf32>, vector<8x128xf32> -> vector<8x128xf32>
    %38 = vector.shape_cast %37 : vector<8x128xf32> to vector<1x8x128xf32>
    %39 = vector.shape_cast %35 : vector<1x128xf32> to vector<1x1x128xf32>
    %40 = vector.broadcast %39 : vector<1x1x128xf32> to vector<1x8x128xf32>
    %41 = arith.addf %38, %40 : vector<1x8x128xf32>
    %cst_35 = arith.constant 0.000000e+00 : f32
    %42 = vector.broadcast %cst_35 : f32 to vector<1x8x128xf32>
    %43 = arith.maximumf %41, %42 : vector<1x8x128xf32>
    %44 = vector.shape_cast %43 : vector<1x8x128xf32> to vector<8x128xf32>
    %c0_36 = arith.constant 0 : index
    %c0_37 = arith.constant 0 : index
    %45 = vector.load %arg14[%c0_36, %c0_37] : memref<128x128xf32, #tpu.memory_space<vmem>>, vector<128x128xf32>
    %cst_38 = arith.constant dense<0.000000e+00> : vector<8x128xf32>
    %46 = tpu.matmul %44, %45, %cst_38 {dimension_numbers = #tpu.dot_dimension_numbers<[1], [0], [0], [1], [0, 0, 1, 1], [], []>} : vector<8x128xf32>, vector<128x128xf32>, vector<8x128xf32> -> vector<8x128xf32>
    %c0_39 = arith.constant 0 : index
    %c0_40 = arith.constant 0 : index
    %47 = vector.load %arg15[%c0_39, %c0_40] : memref<1x128xf32, #tpu.memory_space<vmem>>, vector<1x128xf32>
    %48 = vector.broadcast %47 : vector<1x128xf32> to vector<8x128xf32>
    %49 = arith.addf %46, %48 : vector<8x128xf32>
    %cst_41 = arith.constant 0.000000e+00 : f32
    %50 = vector.broadcast %cst_41 : f32 to vector<8x128xf32>
    %51 = arith.maximumf %49, %50 : vector<8x128xf32>
    %c0_42 = arith.constant 0 : index
    %c0_43 = arith.constant 0 : index
    %52 = vector.load %arg16[%c0_42, %c0_43] : memref<128x128xf32, #tpu.memory_space<vmem>>, vector<128x128xf32>
    %cst_44 = arith.constant dense<0.000000e+00> : vector<8x128xf32>
    %53 = tpu.matmul %51, %52, %cst_44 {dimension_numbers = #tpu.dot_dimension_numbers<[1], [0], [0], [1], [0, 0, 1, 1], [], []>} : vector<8x128xf32>, vector<128x128xf32>, vector<8x128xf32> -> vector<8x128xf32>
    %c0_45 = arith.constant 0 : index
    %c0_46 = arith.constant 0 : index
    %54 = vector.load %arg17[%c0_45, %c0_46] : memref<1x128xf32, #tpu.memory_space<vmem>>, vector<1x128xf32>
    %55 = vector.broadcast %54 : vector<1x128xf32> to vector<8x128xf32>
    %56 = arith.addf %53, %55 : vector<8x128xf32>
    %c0_47 = arith.constant 0 : index
    %c0_48 = arith.constant 0 : index
    %57 = vector.load %arg18[%c0_47, %c0_48] : memref<8x128xf32, #tpu.memory_space<vmem>>, vector<8x128xf32>
    tpu.vector_store %arg18[%c0_47, %c0_48], %56 {strides = array<i32>} : memref<8x128xf32, #tpu.memory_space<vmem>>, vector<8x128xf32>,
    return
  }
  func.func @transform_0(%arg0: i32) -> (i32, i32) {
    %c0_i32 = arith.constant 0 : i32
    %c0_i32_0 = arith.constant 0 : i32
    return %arg0, %c0_i32 : i32, i32
  }
  func.func @transform_1(%arg0: i32) -> (i32, i32) {
    %c0_i32 = arith.constant 0 : i32
    %c0_i32_0 = arith.constant 0 : i32
    return %arg0, %c0_i32 : i32, i32
  }
  func.func @transform_2(%arg0: i32) -> (i32, i32) {
    %c0_i32 = arith.constant 0 : i32
    %c0_i32_0 = arith.constant 0 : i32
    %c0_i32_1 = arith.constant 0 : i32
    return %c0_i32, %c0_i32_0 : i32, i32
  }
  func.func @transform_3(%arg0: i32) -> (i32, i32) {
    %c0_i32 = arith.constant 0 : i32
    %c0_i32_0 = arith.constant 0 : i32
    %c0_i32_1 = arith.constant 0 : i32
    return %c0_i32, %c0_i32_0 : i32, i32
  }
  func.func @transform_4(%arg0: i32) -> (i32, i32) {
    %c0_i32 = arith.constant 0 : i32
    %c0_i32_0 = arith.constant 0 : i32
    %c0_i32_1 = arith.constant 0 : i32
    return %c0_i32, %c0_i32_0 : i32, i32
  }
  func.func @transform_5(%arg0: i32) -> (i32, i32) {
    %c0_i32 = arith.constant 0 : i32
    %c0_i32_0 = arith.constant 0 : i32
    %c0_i32_1 = arith.constant 0 : i32
    return %c0_i32, %c0_i32_0 : i32, i32
  }
  func.func @transform_6(%arg0: i32) -> (i32, i32) {
    %c0_i32 = arith.constant 0 : i32
    %c0_i32_0 = arith.constant 0 : i32
    %c0_i32_1 = arith.constant 0 : i32
    return %c0_i32, %c0_i32_0 : i32, i32
  }
  func.func @transform_7(%arg0: i32) -> (i32, i32) {
    %c0_i32 = arith.constant 0 : i32
    %c0_i32_0 = arith.constant 0 : i32
    %c0_i32_1 = arith.constant 0 : i32
    return %c0_i32, %c0_i32_0 : i32, i32
  }
  func.func @transform_8(%arg0: i32) -> (i32, i32) {
    %c0_i32 = arith.constant 0 : i32
    %c0_i32_0 = arith.constant 0 : i32
    %c0_i32_1 = arith.constant 0 : i32
    return %c0_i32, %c0_i32_0 : i32, i32
  }
  func.func @transform_9(%arg0: i32) -> (i32, i32) {
    %c0_i32 = arith.constant 0 : i32
    %c0_i32_0 = arith.constant 0 : i32
    %c0_i32_1 = arith.constant 0 : i32
    return %c0_i32, %c0_i32_0 : i32, i32
  }
  func.func @transform_10(%arg0: i32) -> (i32, i32) {
    %c0_i32 = arith.constant 0 : i32
    %c0_i32_0 = arith.constant 0 : i32
    %c0_i32_1 = arith.constant 0 : i32
    return %c0_i32, %c0_i32_0 : i32, i32
  }
  func.func @transform_11(%arg0: i32) -> (i32, i32) {
    %c0_i32 = arith.constant 0 : i32
    %c0_i32_0 = arith.constant 0 : i32
    %c0_i32_1 = arith.constant 0 : i32
    return %c0_i32, %c0_i32_0 : i32, i32
  }
  func.func @transform_12(%arg0: i32) -> (i32, i32) {
    %c0_i32 = arith.constant 0 : i32
    %c0_i32_0 = arith.constant 0 : i32
    %c0_i32_1 = arith.constant 0 : i32
    return %c0_i32, %c0_i32_0 : i32, i32
  }
  func.func @transform_13(%arg0: i32) -> (i32, i32) {
    %c0_i32 = arith.constant 0 : i32
    %c0_i32_0 = arith.constant 0 : i32
    %c0_i32_1 = arith.constant 0 : i32
    return %c0_i32, %c0_i32_0 : i32, i32
  }
  func.func @transform_14(%arg0: i32) -> (i32, i32) {
    %c0_i32 = arith.constant 0 : i32
    %c0_i32_0 = arith.constant 0 : i32
    %c0_i32_1 = arith.constant 0 : i32
    return %c0_i32, %c0_i32_0 : i32, i32
  }
  func.func @transform_15(%arg0: i32) -> (i32, i32) {
    %c0_i32 = arith.constant 0 : i32
    %c0_i32_0 = arith.constant 0 : i32
    %c0_i32_1 = arith.constant 0 : i32
    return %c0_i32, %c0_i32_0 : i32, i32
  }
  func.func @transform_16(%arg0: i32) -> (i32, i32) {
    %c0_i32 = arith.constant 0 : i32
    %c0_i32_0 = arith.constant 0 : i32
    %c0_i32_1 = arith.constant 0 : i32
    return %c0_i32, %c0_i32_0 : i32, i32
  }
  func.func @transform_17(%arg0: i32) -> (i32, i32) {
    %c0_i32 = arith.constant 0 : i32
    %c0_i32_0 = arith.constant 0 : i32
    return %arg0, %c0_i32 : i32, i32
  }
}

</mosaic_0001>

<llo_original>
// kernel: tpu_custom_call.1
$region0: #{tpu_custom_call.1}
  #allocation0 [shape = 'u32[]', space=smem, size = 0x4, offset = 0x4, fixed_abs, tag = 'smem constant byte address 0x4 - core index']
  #allocation1 [shape = 'u32[144,128]{1,0:T(1,128)}', space=vmem, size = 0x12000, scoped, tag = 'internal scratch']
  %s0 = inlined_call_operand.vmem [shape: f32[16,2], index: 0, kind: input, shape index: {}]
  %s1 = inlined_call_operand.vmem [shape: f32[16,1], index: 1, kind: input, shape index: {}]
  %s2 = inlined_call_operand.vmem [shape: f32[2,128], index: 2, kind: input, shape index: {}]
  %s3 = inlined_call_operand.vmem [shape: f32[1,128], index: 3, kind: input, shape index: {}]
  %s4 = inlined_call_operand.hbm [shape: f32[128,128], index: 4, kind: input, shape index: {}]
  %s5 = inlined_call_operand.vmem [shape: f32[1,128], index: 5, kind: input, shape index: {}]
  %s6 = inlined_call_operand.hbm [shape: f32[128,128], index: 6, kind: input, shape index: {}]
  %s7 = inlined_call_operand.vmem [shape: f32[1,128], index: 7, kind: input, shape index: {}]
  %s8 = inlined_call_operand.hbm [shape: f32[128,128], index: 8, kind: input, shape index: {}]
  %s9 = inlined_call_operand.vmem [shape: f32[1,128], index: 9, kind: input, shape index: {}]
  %s10 = inlined_call_operand.hbm [shape: f32[128,128], index: 10, kind: input, shape index: {}]
  %s11 = inlined_call_operand.vmem [shape: f32[1,128], index: 11, kind: input, shape index: {}]
  %s12 = inlined_call_operand.vmem [shape: f32[1,128], index: 12, kind: input, shape index: {}]
  %s13 = inlined_call_operand.hbm [shape: f32[128,128], index: 13, kind: input, shape index: {}]
  %s14 = inlined_call_operand.vmem [shape: f32[1,128], index: 14, kind: input, shape index: {}]
  %s15 = inlined_call_operand.hbm [shape: f32[128,128], index: 15, kind: input, shape index: {}]
  %s16 = inlined_call_operand.vmem [shape: f32[1,128], index: 16, kind: input, shape index: {}]
  %s17 = inlined_call_operand.hbm [shape: f32[16,128], index: 17, kind: output, shape index: {}]
  %s18 = sld [smem:[#allocation0]]
  $region125: #{tpu_custom_call.1} parent=0
    _
  %s20 = ssub.s32 1, %s18
  %s21 = scalar_select 0, %s20, %s18
  $region1: #{tpu_custom_call.1} parent=0
    #allocation2 [shape = 'u8[65536]{0}', space=vmem, size = 0x10000, scoped, tag = 'input window, operand 4, single buffered']
    #allocation3 [shape = 's32[2]{0}', space=sflag, size = 0x8, scoped, tag = 'scoped memory for tpu_custom_call.1']
    #allocation4 [shape = 's32[2]{0}', space=sflag, size = 0x8, scoped, tag = 'scoped memory for tpu_custom_call.1']
    #allocation5 [shape = 'u8[65536]{0}', space=vmem, size = 0x10000, scoped, tag = 'input window, operand 6, single buffered']
    #allocation6 [shape = 's32[1]{0}', space=sflag, size = 0x4, scoped, tag = 'scoped memory for tpu_custom_call.1']
    #allocation7 [shape = 'u8[65536]{0}', space=vmem, size = 0x10000, scoped, tag = 'input window, operand 8, single buffered']
    #allocation8 [shape = 'u8[65536]{0}', space=vmem, size = 0x10000, scoped, tag = 'input window, operand 10, single buffered']
    #allocation9 [shape = 's32[1]{0}', space=sflag, size = 0x4, scoped, tag = 'scoped memory for tpu_custom_call.1']
    #allocation10 [shape = 'u8[65536]{0}', space=vmem, size = 0x10000, scoped, tag = 'input window, operand 13, single buffered']
    #allocation11 [shape = 'u8[65536]{0}', space=vmem, size = 0x10000, scoped, tag = 'input window, operand 15, single buffered']
    #allocation12 [shape = 's32[1]{0}', space=sflag, size = 0x4, scoped, tag = 'scoped memory for tpu_custom_call.1']
    #allocation13 [shape = 'u8[8192]{0}', space=vmem, size = 0x2000, scoped, tag = 'output window, operand 0']
    %22 = vsyncpa [#allocation3], 0
    %23 = vsyncpa [#allocation6], 0
    %24 = vsyncpa [#allocation9], 0
    %25 = vsyncpa [#allocation12], 0
    %26 = vsyncpa [#allocation4], 0
    %s27 = scalar_lea.sflag [#allocation4], 1
    %28 = vsyncpa %s27, 0
    loop: start=0, step=1, limit=4
    $region2: #{tpu_custom_call.1} parent=1 // loop_pre_header
      _
    $region3: #{tpu_custom_call.1} parent=1 // loop_header
      %s30 = sphi 0, %s34
      %p31 = scmp.ge.s32.totalorder %s30, 4
      %s40 = sphi 0, %s42
      %s43 = sphi 0, %s40
      %s44 = sphi 0, %s43
      %s60 = sphi 0, %s44
      %s66 = sphi 0, %s68
      %s69 = sphi 0, %s66
      %s70 = sphi 0, %s69
      %s86 = sphi 0, %s70
      %s90 = sphi 0, %s90
      %s92 = sphi 0, %s90
      %s93 = sphi 0, %s92
      %s107 = sphi 0, %s93
      %s111 = sphi 0, %s111
      %s113 = sphi 0, %s111
      %s114 = sphi 0, %s113
      %s128 = sphi 0, %s114
      %s132 = sphi 0, %s132
      %s134 = sphi 0, %s132
      %s135 = sphi 0, %s134
      %s149 = sphi 0, %s135
      %s153 = sphi 0, %s153
      %s155 = sphi 0, %s153
      %s156 = sphi 0, %s155
      %s170 = sphi 0, %s156
      %s174 = sphi 0, %s174
      %s176 = sphi 0, %s174
      %s177 = sphi 0, %s176
      %s191 = sphi 0, %s177
      %s195 = sphi 0, %s195
      %s197 = sphi 0, %s195
      %s198 = sphi 0, %s197
      %s212 = sphi 0, %s198
      %s216 = sphi 0, %s216
      %s218 = sphi 0, %s216
      %s219 = sphi 0, %s218
      %s233 = sphi 0, %s219
      %s237 = sphi 0, %s237
      %s239 = sphi 0, %s237
      %s240 = sphi 0, %s239
      %s254 = sphi 0, %s240
      %s258 = sphi 0, %s258
      %s260 = sphi 0, %s258
      %s261 = sphi 0, %s260
      %s275 = sphi 0, %s261
      %s279 = sphi 0, %s279
      %s281 = sphi 0, %s279
      %s282 = sphi 0, %s281
      %s296 = sphi 0, %s282
      %s300 = sphi 0, %s300
      %s302 = sphi 0, %s300
      %s303 = sphi 0, %s302
      %s317 = sphi 0, %s303
      %s321 = sphi 0, %s321
      %s323 = sphi 0, %s321
      %s324 = sphi 0, %s323
      %s338 = sphi 0, %s324
      %s342 = sphi 0, %s342
      %s344 = sphi 0, %s342
      %s345 = sphi 0, %s344
      %s359 = sphi 0, %s345
      %s363 = sphi 0, %s363
      %s365 = sphi 0, %s363
      %s366 = sphi 0, %s365
      %s380 = sphi 0, %s366
      %s384 = sphi 0, %s384
      %s386 = sphi 0, %s384
      %s387 = sphi 0, %s386
      %s401 = sphi 0, %s387
      %s407 = sphi 0, %s409
      %s410 = sphi 0, %s407
      %s411 = sphi 0, %s410
      %s427 = sphi 0, %s411
    $region4: #{tpu_custom_call.1} parent=1 // loop_header_branch
      %33 = sbr.rel (%p31) target = $region8
    $region5: #{tpu_custom_call.1} parent=1 // loop_body
      %s35 = ssub.s32 %s30, 1
      %s36 = ssub.s32 %s30, 2
      %s37 = sadd.s32 %s30, 1
      %s38 = ssub.s32 %s30, %s37
      %p39 = scmp.eq.s32.totalorder %s38, 0
      %s41 = sadd.s32 %s40, 1
      %s42 = scalar_select %p39, %s40, %s41
      %p45 = pneg %p39
      %p46 = scmp.eq.s32.totalorder %s30, 1
      %p47 = por %p45, %p46
      %p48 = scmp.ne.s32.totalorder %s40, %s43
      %p49 = scmp.eq.s32.totalorder %s30, 0
      %p50 = por %p48, %p49
      %p51 = scmp.ne.s32.totalorder %s40, %s43
      %p52 = scmp.eq.s32.totalorder %s35, 1
      %p53 = por %p51, %p52
      %p54 = scmp.ne.s32.totalorder %s43, %s44
      %p55 = scmp.eq.s32.totalorder %s35, 0
      %p56 = por %p54, %p55
      %p57 = scmp.ne.s32.totalorder %s43, %s44
      %p58 = scmp.eq.s32.totalorder %s36, 1
      %p59 = por %p57, %p58
      %p61 = scmp.ne.s32.totalorder %s44, %s60
      %p62 = scmp.eq.s32.totalorder %s36, 0
      %p63 = por %p61, %p62
      %s64 = ssub.s32 %s30, %s37
      %p65 = scmp.eq.s32.totalorder %s64, 0
      %s67 = sadd.s32 %s66, 1
      %s68 = scalar_select %p65, %s66, %s67
      %p71 = pneg %p65
      %p72 = scmp.eq.s32.totalorder %s30, 1
      %p73 = por %p71, %p72
      %p74 = scmp.ne.s32.totalorder %s66, %s69
      %p75 = scmp.eq.s32.totalorder %s30, 0
      %p76 = por %p74, %p75
      %p77 = scmp.ne.s32.totalorder %s66, %s69
      %p78 = scmp.eq.s32.totalorder %s35, 1
      %p79 = por %p77, %p78
      %p80 = scmp.ne.s32.totalorder %s69, %s70
      %p81 = scmp.eq.s32.totalorder %s35, 0
      %p82 = por %p80, %p81
      %p83 = scmp.ne.s32.totalorder %s69, %s70
      %p84 = scmp.eq.s32.totalorder %s36, 1
      %p85 = por %p83, %p84
      %p87 = scmp.ne.s32.totalorder %s70, %s86
      %p88 = scmp.eq.s32.totalorder %s36, 0
      %p89 = por %p87, %p88
      %s91 = sadd.s32 %s90, 1
      %p94 = scmp.eq.s32.totalorder %s30, 1
      %p95 = scmp.ne.s32.totalorder %s90, %s92
      %p96 = scmp.eq.s32.totalorder %s30, 0
      %p97 = por %p95, %p96
      %p98 = scmp.ne.s32.totalorder %s90, %s92
      %p99 = scmp.eq.s32.totalorder %s35, 1
      %p100 = por %p98, %p99
      %p101 = scmp.ne.s32.totalorder %s92, %s93
      %p102 = scmp.eq.s32.totalorder %s35, 0
      %p103 = por %p101, %p102
      %p104 = scmp.ne.s32.totalorder %s92, %s93
      %p105 = scmp.eq.s32.totalorder %s36, 1
      %p106 = por %p104, %p105
      %p108 = scmp.ne.s32.totalorder %s93, %s107
      %p109 = scmp.eq.s32.totalorder %s36, 0
      %p110 = por %p108, %p109
      %s112 = sadd.s32 %s111, 1
      %p115 = scmp.eq.s32.totalorder %s30, 1
      %p116 = scmp.ne.s32.totalorder %s111, %s113
      %p117 = scmp.eq.s32.totalorder %s30, 0
      %p118 = por %p116, %p117
      %p119 = scmp.ne.s32.totalorder %s111, %s113
      %p120 = scmp.eq.s32.totalorder %s35, 1
      %p121 = por %p119, %p120
      %p122 = scmp.ne.s32.totalorder %s113, %s114
      %p123 = scmp.eq.s32.totalorder %s35, 0
      %p124 = por %p122, %p123
      %p125 = scmp.ne.s32.totalorder %s113, %s114
      %p126 = scmp.eq.s32.totalorder %s36, 1
      %p127 = por %p125, %p126
      %p129 = scmp.ne.s32.totalorder %s114, %s128
      %p130 = scmp.eq.s32.totalorder %s36, 0
      %p131 = por %p129, %p130
      %s133 = sadd.s32 %s132, 1
      %p136 = scmp.eq.s32.totalorder %s30, 1
      %p137 = scmp.ne.s32.totalorder %s132, %s134
      %p138 = scmp.eq.s32.totalorder %s30, 0
      %p139 = por %p137, %p138
      %p140 = scmp.ne.s32.totalorder %s132, %s134
      %p141 = scmp.eq.s32.totalorder %s35, 1
      %p142 = por %p140, %p141
      %p143 = scmp.ne.s32.totalorder %s134, %s135
      %p144 = scmp.eq.s32.totalorder %s35, 0
      %p145 = por %p143, %p144
      %p146 = scmp.ne.s32.totalorder %s134, %s135
      %p147 = scmp.eq.s32.totalorder %s36, 1
      %p148 = por %p146, %p147
      %p150 = scmp.ne.s32.totalorder %s135, %s149
      %p151 = scmp.eq.s32.totalorder %s36, 0
      %p152 = por %p150, %p151
      %s154 = sadd.s32 %s153, 1
      %p157 = scmp.eq.s32.totalorder %s30, 1
      %p158 = scmp.ne.s32.totalorder %s153, %s155
      %p159 = scmp.eq.s32.totalorder %s30, 0
      %p160 = por %p158, %p159
      %p161 = scmp.ne.s32.totalorder %s153, %s155
      %p162 = scmp.eq.s32.totalorder %s35, 1
      %p163 = por %p161, %p162
      %p164 = scmp.ne.s32.totalorder %s155, %s156
      %p165 = scmp.eq.s32.totalorder %s35, 0
      %p166 = por %p164, %p165
      %p167 = scmp.ne.s32.totalorder %s155, %s156
      %p168 = scmp.eq.s32.totalorder %s36, 1
      %p169 = por %p167, %p168
      %p171 = scmp.ne.s32.totalorder %s156, %s170
      %p172 = scmp.eq.s32.totalorder %s36, 0
      %p173 = por %p171, %p172
      %s175 = sadd.s32 %s174, 1
      %p178 = scmp.eq.s32.totalorder %s30, 1
      %p179 = scmp.ne.s32.totalorder %s174, %s176
      %p180 = scmp.eq.s32.totalorder %s30, 0
      %p181 = por %p179, %p180
      %p182 = scmp.ne.s32.totalorder %s174, %s176
      %p183 = scmp.eq.s32.totalorder %s35, 1
      %p184 = por %p182, %p183
      %p185 = scmp.ne.s32.totalorder %s176, %s177
      %p186 = scmp.eq.s32.totalorder %s35, 0
      %p187 = por %p185, %p186
      %p188 = scmp.ne.s32.totalorder %s176, %s177
      %p189 = scmp.eq.s32.totalorder %s36, 1
      %p190 = por %p188, %p189
      %p192 = scmp.ne.s32.totalorder %s177, %s191
      %p193 = scmp.eq.s32.totalorder %s36, 0
      %p194 = por %p192, %p193
      %s196 = sadd.s32 %s195, 1
      %p199 = scmp.eq.s32.totalorder %s30, 1
      %p200 = scmp.ne.s32.totalorder %s195, %s197
      %p201 = scmp.eq.s32.totalorder %s30, 0
      %p202 = por %p200, %p201
      %p203 = scmp.ne.s32.totalorder %s195, %s197
      %p204 = scmp.eq.s32.totalorder %s35, 1
      %p205 = por %p203, %p204
      %p206 = scmp.ne.s32.totalorder %s197, %s198
      %p207 = scmp.eq.s32.totalorder %s35, 0
      %p208 = por %p206, %p207
      %p209 = scmp.ne.s32.totalorder %s197, %s198
      %p210 = scmp.eq.s32.totalorder %s36, 1
      %p211 = por %p209, %p210
      %p213 = scmp.ne.s32.totalorder %s198, %s212
      %p214 = scmp.eq.s32.totalorder %s36, 0
      %p215 = por %p213, %p214
      %s217 = sadd.s32 %s216, 1
      %p220 = scmp.eq.s32.totalorder %s30, 1
      %p221 = scmp.ne.s32.totalorder %s216, %s218
      %p222 = scmp.eq.s32.totalorder %s30, 0
      %p223 = por %p221, %p222
      %p224 = scmp.ne.s32.totalorder %s216, %s218
      %p225 = scmp.eq.s32.totalorder %s35, 1
      %p226 = por %p224, %p225
      %p227 = scmp.ne.s32.totalorder %s218, %s219
      %p228 = scmp.eq.s32.totalorder %s35, 0
      %p229 = por %p227, %p228
      %p230 = scmp.ne.s32.totalorder %s218, %s219
      %p231 = scmp.eq.s32.totalorder %s36, 1
      %p232 = por %p230, %p231
      %p234 = scmp.ne.s32.totalorder %s219, %s233
      %p235 = scmp.eq.s32.totalorder %s36, 0
      %p236 = por %p234, %p235
      %s238 = sadd.s32 %s237, 1
      %p241 = scmp.eq.s32.totalorder %s30, 1
      %p242 = scmp.ne.s32.totalorder %s237, %s239
      %p243 = scmp.eq.s32.totalorder %s30, 0
      %p244 = por %p242, %p243
      %p245 = scmp.ne.s32.totalorder %s237, %s239
      %p246 = scmp.eq.s32.totalorder %s35, 1
      %p247 = por %p245, %p246
      %p248 = scmp.ne.s32.totalorder %s239, %s240
      %p249 = scmp.eq.s32.totalorder %s35, 0
      %p250 = por %p248, %p249
      %p251 = scmp.ne.s32.totalorder %s239, %s240
      %p252 = scmp.eq.s32.totalorder %s36, 1
      %p253 = por %p251, %p252
      %p255 = scmp.ne.s32.totalorder %s240, %s254
      %p256 = scmp.eq.s32.totalorder %s36, 0
      %p257 = por %p255, %p256
      %s259 = sadd.s32 %s258, 1
      %p262 = scmp.eq.s32.totalorder %s30, 1
      %p263 = scmp.ne.s32.totalorder %s258, %s260
      %p264 = scmp.eq.s32.totalorder %s30, 0
      %p265 = por %p263, %p264
      %p266 = scmp.ne.s32.totalorder %s258, %s260
      %p267 = scmp.eq.s32.totalorder %s35, 1
      %p268 = por %p266, %p267
      %p269 = scmp.ne.s32.totalorder %s260, %s261
      %p270 = scmp.eq.s32.totalorder %s35, 0
      %p271 = por %p269, %p270
      %p272 = scmp.ne.s32.totalorder %s260, %s261
      %p273 = scmp.eq.s32.totalorder %s36, 1
      %p274 = por %p272, %p273
      %p276 = scmp.ne.s32.totalorder %s261, %s275
      %p277 = scmp.eq.s32.totalorder %s36, 0
      %p278 = por %p276, %p277
      %s280 = sadd.s32 %s279, 1
      %p283 = scmp.eq.s32.totalorder %s30, 1
      %p284 = scmp.ne.s32.totalorder %s279, %s281
      %p285 = scmp.eq.s32.totalorder %s30, 0
      %p286 = por %p284, %p285
      %p287 = scmp.ne.s32.totalorder %s279, %s281
      %p288 = scmp.eq.s32.totalorder %s35, 1
      %p289 = por %p287, %p288
      %p290 = scmp.ne.s32.totalorder %s281, %s282
      %p291 = scmp.eq.s32.totalorder %s35, 0
      %p292 = por %p290, %p291
      %p293 = scmp.ne.s32.totalorder %s281, %s282
      %p294 = scmp.eq.s32.totalorder %s36, 1
      %p295 = por %p293, %p294
      %p297 = scmp.ne.s32.totalorder %s282, %s296
      %p298 = scmp.eq.s32.totalorder %s36, 0
      %p299 = por %p297, %p298
      %s301 = sadd.s32 %s300, 1
      %p304 = scmp.eq.s32.totalorder %s30, 1
      %p305 = scmp.ne.s32.totalorder %s300, %s302
      %p306 = scmp.eq.s32.totalorder %s30, 0
      %p307 = por %p305, %p306
      %p308 = scmp.ne.s32.totalorder %s300, %s302
      %p309 = scmp.eq.s32.totalorder %s35, 1
      %p310 = por %p308, %p309
      %p311 = scmp.ne.s32.totalorder %s302, %s303
      %p312 = scmp.eq.s32.totalorder %s35, 0
      %p313 = por %p311, %p312
      %p314 = scmp.ne.s32.totalorder %s302, %s303
      %p315 = scmp.eq.s32.totalorder %s36, 1
      %p316 = por %p314, %p315
      %p318 = scmp.ne.s32.totalorder %s303, %s317
      %p319 = scmp.eq.s32.totalorder %s36, 0
      %p320 = por %p318, %p319
      %s322 = sadd.s32 %s321, 1
      %p325 = scmp.eq.s32.totalorder %s30, 1
      %p326 = scmp.ne.s32.totalorder %s321, %s323
      %p327 = scmp.eq.s32.totalorder %s30, 0
      %p328 = por %p326, %p327
      %p329 = scmp.ne.s32.totalorder %s321, %s323
      %p330 = scmp.eq.s32.totalorder %s35, 1
      %p331 = por %p329, %p330
      %p332 = scmp.ne.s32.totalorder %s323, %s324
      %p333 = scmp.eq.s32.totalorder %s35, 0
      %p334 = por %p332, %p333
      %p335 = scmp.ne.s32.totalorder %s323, %s324
      %p336 = scmp.eq.s32.totalorder %s36, 1
      %p337 = por %p335, %p336
      %p339 = scmp.ne.s32.totalorder %s324, %s338
      %p340 = scmp.eq.s32.totalorder %s36, 0
      %p341 = por %p339, %p340
      %s343 = sadd.s32 %s342, 1
      %p346 = scmp.eq.s32.totalorder %s30, 1
      %p347 = scmp.ne.s32.totalorder %s342, %s344
      %p348 = scmp.eq.s32.totalorder %s30, 0
      %p349 = por %p347, %p348
      %p350 = scmp.ne.s32.totalorder %s342, %s344
      %p351 = scmp.eq.s32.totalorder %s35, 1
      %p352 = por %p350, %p351
      %p353 = scmp.ne.s32.totalorder %s344, %s345
      %p354 = scmp.eq.s32.totalorder %s35, 0
      %p355 = por %p353, %p354
      %p356 = scmp.ne.s32.totalorder %s344, %s345
      %p357 = scmp.eq.s32.totalorder %s36, 1
      %p358 = por %p356, %p357
      %p360 = scmp.ne.s32.totalorder %s345, %s359
      %p361 = scmp.eq.s32.totalorder %s36, 0
      %p362 = por %p360, %p361
      %s364 = sadd.s32 %s363, 1
      %p367 = scmp.eq.s32.totalorder %s30, 1
      %p368 = scmp.ne.s32.totalorder %s363, %s365
      %p369 = scmp.eq.s32.totalorder %s30, 0
      %p370 = por %p368, %p369
      %p371 = scmp.ne.s32.totalorder %s363, %s365
      %p372 = scmp.eq.s32.totalorder %s35, 1
      %p373 = por %p371, %p372
      %p374 = scmp.ne.s32.totalorder %s365, %s366
      %p375 = scmp.eq.s32.totalorder %s35, 0
      %p376 = por %p374, %p375
      %p377 = scmp.ne.s32.totalorder %s365, %s366
      %p378 = scmp.eq.s32.totalorder %s36, 1
      %p379 = por %p377, %p378
      %p381 = scmp.ne.s32.totalorder %s366, %s380
      %p382 = scmp.eq.s32.totalorder %s36, 0
      %p383 = por %p381, %p382
      %s385 = sadd.s32 %s384, 1
      %p388 = scmp.eq.s32.totalorder %s30, 1
      %p389 = scmp.ne.s32.totalorder %s384, %s386
      %p390 = scmp.eq.s32.totalorder %s30, 0
      %p391 = por %p389, %p390
      %p392 = scmp.ne.s32.totalorder %s384, %s386
      %p393 = scmp.eq.s32.totalorder %s35, 1
      %p394 = por %p392, %p393
      %p395 = scmp.ne.s32.totalorder %s386, %s387
      %p396 = scmp.eq.s32.totalorder %s35, 0
      %p397 = por %p395, %p396
      %p398 = scmp.ne.s32.totalorder %s386, %s387
      %p399 = scmp.eq.s32.totalorder %s36, 1
      %p400 = por %p398, %p399
      %p402 = scmp.ne.s32.totalorder %s387, %s401
      %p403 = scmp.eq.s32.totalorder %s36, 0
      %p404 = por %p402, %p403
      %s405 = ssub.s32 %s30, %s37
      %p406 = scmp.eq.s32.totalorder %s405, 0
      %s408 = sadd.s32 %s407, 1
      %s409 = scalar_select %p406, %s407, %s408
      %p412 = pneg %p406
      %p413 = scmp.eq.s32.totalorder %s30, 1
      %p414 = por %p412, %p413
      %p415 = scmp.ne.s32.totalorder %s407, %s410
      %p416 = scmp.eq.s32.totalorder %s30, 0
      %p417 = por %p415, %p416
      %p418 = scmp.ne.s32.totalorder %s407, %s410
      %p419 = scmp.eq.s32.totalorder %s35, 1
      %p420 = por %p418, %p419
      %p421 = scmp.ne.s32.totalorder %s410, %s411
      %p422 = scmp.eq.s32.totalorder %s35, 0
      %p423 = por %p421, %p422
      %p424 = scmp.ne.s32.totalorder %s410, %s411
      %p425 = scmp.eq.s32.totalorder %s36, 1
      %p426 = por %p424, %p425
      %p428 = scmp.ne.s32.totalorder %s411, %s427
      %p429 = scmp.eq.s32.totalorder %s36, 0
      %p430 = por %p428, %p429
      %p431 = scmp.le.s32.totalorder 1, %s30
      %p432 = scmp.lt.s32.totalorder %s30, 3
      %p433 = pnand %p431, %p432
      %p434 = pneg %p433
      // Predicated region
      $region9: #{tpu_custom_call.1} parent=5 // pred_check
        _
      $region10: #{tpu_custom_call.1} parent=5 // pred_check_branch
        %436 = sbr.rel (%p433) target = $region12
      $region11: #{tpu_custom_call.1} parent=5 // pred_region
        %s437 = ssub.s32 %s30, 1
        // Predicated region
        $region13: #{tpu_custom_call.1} parent=11 // pred_check
          %p438 = pneg %p103
        $region14: #{tpu_custom_call.1} parent=11 // pred_check_branch
          %440 = sbr.rel (%p438) target = $region16
        $region15: #{tpu_custom_call.1} parent=11 // pred_region
          _
        $region16: #{tpu_custom_call.1} parent=11 // pred_fallthru
          _
        // Predicated region
        $region17: #{tpu_custom_call.1} parent=11 // pred_check
          %p441 = pneg %p124
        $region18: #{tpu_custom_call.1} parent=11 // pred_check_branch
          %443 = sbr.rel (%p441) target = $region20
        $region19: #{tpu_custom_call.1} parent=11 // pred_region
          _
        $region20: #{tpu_custom_call.1} parent=11 // pred_fallthru
          _
        // Predicated region
        $region21: #{tpu_custom_call.1} parent=11 // pred_check
          %p444 = pneg %p145
        $region22: #{tpu_custom_call.1} parent=11 // pred_check_branch
          %446 = sbr.rel (%p444) target = $region24
        $region23: #{tpu_custom_call.1} parent=11 // pred_region
          %s448 = ssub.s32 2048, 2048
          %449 = vsyncadd [#allocation3], %s448
          %s450 = sshll.u32 [#allocation2], 4
          %s451 = int_to_ptr.vmem [resolvable:$true] %s450
          %456 = dma.hbm_to_vmem [thread:$0]  %s4, 2048, %s451, [#allocation3], 128, 128, 8
        $region24: #{tpu_custom_call.1} parent=11 // pred_fallthru
          _
        // Predicated region
        $region25: #{tpu_custom_call.1} parent=11 // pred_check
          %p457 = pneg %p166
        $region26: #{tpu_custom_call.1} parent=11 // pred_check_branch
          %459 = sbr.rel (%p457) target = $region28
        $region27: #{tpu_custom_call.1} parent=11 // pred_region
          _
        $region28: #{tpu_custom_call.1} parent=11 // pred_fallthru
          _
        // Predicated region
        $region29: #{tpu_custom_call.1} parent=11 // pred_check
          %p460 = pneg %p187
        $region30: #{tpu_custom_call.1} parent=11 // pred_check_branch
          %462 = sbr.rel (%p460) target = $region32
        $region31: #{tpu_custom_call.1} parent=11 // pred_region
          %s464 = ssub.s32 2048, 2048
          %465 = vsyncadd [#allocation6], %s464
          %s466 = sshll.u32 [#allocation5], 4
          %s467 = int_to_ptr.vmem [resolvable:$true] %s466
          %472 = dma.hbm_to_vmem [thread:$0]  %s6, 2048, %s467, [#allocation6], 128, 128, 8
        $region32: #{tpu_custom_call.1} parent=11 // pred_fallthru
          _
        // Predicated region
        $region33: #{tpu_custom_call.1} parent=11 // pred_check
          %p473 = pneg %p208
        $region34: #{tpu_custom_call.1} parent=11 // pred_check_branch
          %475 = sbr.rel (%p473) target = $region36
        $region35: #{tpu_custom_call.1} parent=11 // pred_region
          _
        $region36: #{tpu_custom_call.1} parent=11 // pred_fallthru
          _
        // Predicated region
        $region37: #{tpu_custom_call.1} parent=11 // pred_check
          %p476 = pneg %p229
        $region38: #{tpu_custom_call.1} parent=11 // pred_check_branch
          %478 = sbr.rel (%p476) target = $region40
        $region39: #{tpu_custom_call.1} parent=11 // pred_region
          %s480 = ssub.s32 2048, 2048
          %481 = vsyncadd [#allocation6], %s480
          %s482 = sshll.u32 [#allocation7], 4
          %s483 = int_to_ptr.vmem [resolvable:$true] %s482
          %488 = dma.hbm_to_vmem [thread:$0]  %s8, 2048, %s483, [#allocation6], 128, 128, 8
        $region40: #{tpu_custom_call.1} parent=11 // pred_fallthru
          _
        // Predicated region
        $region41: #{tpu_custom_call.1} parent=11 // pred_check
          %p489 = pneg %p250
        $region42: #{tpu_custom_call.1} parent=11 // pred_check_branch
          %491 = sbr.rel (%p489) target = $region44
        $region43: #{tpu_custom_call.1} parent=11 // pred_region
          _
        $region44: #{tpu_custom_call.1} parent=11 // pred_fallthru
          _
        // Predicated region
        $region45: #{tpu_custom_call.1} parent=11 // pred_check
          %p492 = pneg %p271
        $region46: #{tpu_custom_call.1} parent=11 // pred_check_branch
          %494 = sbr.rel (%p492) target = $region48
        $region47: #{tpu_custom_call.1} parent=11 // pred_region
          %s496 = ssub.s32 2048, 2048
          %497 = vsyncadd [#allocation9], %s496
          %s498 = sshll.u32 [#allocation8], 4
          %s499 = int_to_ptr.vmem [resolvable:$true] %s498
          %504 = dma.hbm_to_vmem [thread:$0]  %s10, 2048, %s499, [#allocation9], 128, 128, 8
        $region48: #{tpu_custom_call.1} parent=11 // pred_fallthru
          _
        // Predicated region
        $region49: #{tpu_custom_call.1} parent=11 // pred_check
          %p505 = pneg %p292
        $region50: #{tpu_custom_call.1} parent=11 // pred_check_branch
          %507 = sbr.rel (%p505) target = $region52
        $region51: #{tpu_custom_call.1} parent=11 // pred_region
          _
        $region52: #{tpu_custom_call.1} parent=11 // pred_fallthru
          _
        // Predicated region
        $region53: #{tpu_custom_call.1} parent=11 // pred_check
          %p508 = pneg %p313
        $region54: #{tpu_custom_call.1} parent=11 // pred_check_branch
          %510 = sbr.rel (%p508) target = $region56
        $region55: #{tpu_custom_call.1} parent=11 // pred_region
          _
        $region56: #{tpu_custom_call.1} parent=11 // pred_fallthru
          _
        // Predicated region
        $region57: #{tpu_custom_call.1} parent=11 // pred_check
          %p511 = pneg %p334
        $region58: #{tpu_custom_call.1} parent=11 // pred_check_branch
          %513 = sbr.rel (%p511) target = $region60
        $region59: #{tpu_custom_call.1} parent=11 // pred_region
          %s515 = ssub.s32 2048, 2048
          %516 = vsyncadd [#allocation9], %s515
          %s517 = sshll.u32 [#allocation10], 4
          %s518 = int_to_ptr.vmem [resolvable:$true] %s517
          %523 = dma.hbm_to_vmem [thread:$0]  %s13, 2048, %s518, [#allocation9], 128, 128, 8
        $region60: #{tpu_custom_call.1} parent=11 // pred_fallthru
          _
        // Predicated region
        $region61: #{tpu_custom_call.1} parent=11 // pred_check
          %p524 = pneg %p355
        $region62: #{tpu_custom_call.1} parent=11 // pred_check_branch
          %526 = sbr.rel (%p524) target = $region64
        $region63: #{tpu_custom_call.1} parent=11 // pred_region
          _
        $region64: #{tpu_custom_call.1} parent=11 // pred_fallthru
          _
        // Predicated region
        $region65: #{tpu_custom_call.1} parent=11 // pred_check
          %p527 = pneg %p376
        $region66: #{tpu_custom_call.1} parent=11 // pred_check_branch
          %529 = sbr.rel (%p527) target = $region68
        $region67: #{tpu_custom_call.1} parent=11 // pred_region
          %s531 = ssub.s32 2048, 2048
          %532 = vsyncadd [#allocation12], %s531
          %s533 = sshll.u32 [#allocation11], 4
          %s534 = int_to_ptr.vmem [resolvable:$true] %s533
          %539 = dma.hbm_to_vmem [thread:$0]  %s15, 2048, %s534, [#allocation12], 128, 128, 8
        $region68: #{tpu_custom_call.1} parent=11 // pred_fallthru
          _
        // Predicated region
        $region69: #{tpu_custom_call.1} parent=11 // pred_check
          %p540 = pneg %p397
        $region70: #{tpu_custom_call.1} parent=11 // pred_check_branch
          %542 = sbr.rel (%p540) target = $region72
        $region71: #{tpu_custom_call.1} parent=11 // pred_region
          _
        $region72: #{tpu_custom_call.1} parent=11 // pred_fallthru
          _
      $region12: #{tpu_custom_call.1} parent=5 // pred_fallthru
        _
      %p543 = scmp.lt.s32.totalorder %s30, 2
      // Predicated region
      $region73: #{tpu_custom_call.1} parent=5 // pred_check
        %p544 = pneg %p543
      $region74: #{tpu_custom_call.1} parent=5 // pred_check_branch
        %546 = sbr.rel (%p544) target = $region76
      $region75: #{tpu_custom_call.1} parent=5 // pred_region
        // Predicated region
        $region77: #{tpu_custom_call.1} parent=75 // pred_check
          %p547 = pneg %p50
        $region78: #{tpu_custom_call.1} parent=75 // pred_check_branch
          %549 = sbr.rel (%p547) target = $region80
        $region79: #{tpu_custom_call.1} parent=75 // pred_region
          %p550 = scmp.lt.s32.totalorder %s30, 1
          %s551 = scalar_select %p550, %s30, 1
          %s552 = smul.addr %s551, 8
          %s553 = scalar_lea.vmem %s0, %s552
        $region80: #{tpu_custom_call.1} parent=75 // pred_fallthru
          _
        // Predicated region
        $region81: #{tpu_custom_call.1} parent=75 // pred_check
          %p554 = pneg %p76
        $region82: #{tpu_custom_call.1} parent=75 // pred_check_branch
          %556 = sbr.rel (%p554) target = $region84
        $region83: #{tpu_custom_call.1} parent=75 // pred_region
          %p557 = scmp.lt.s32.totalorder %s30, 1
          %s558 = scalar_select %p557, %s30, 1
          %s559 = smul.addr %s558, 8
          %s560 = scalar_lea.vmem %s1, %s559
        $region84: #{tpu_custom_call.1} parent=75 // pred_fallthru
          _
      $region76: #{tpu_custom_call.1} parent=5 // pred_fallthru
        _
      %p561 = scmp.le.s32.totalorder 1, %s30
      %p562 = scmp.lt.s32.totalorder %s30, 3
      %p563 = pnand %p561, %p562
      %p564 = pneg %p563
      // Predicated region
      $region85: #{tpu_custom_call.1} parent=5 // pred_check
        _
      $region86: #{tpu_custom_call.1} parent=5 // pred_check_branch
        %566 = sbr.rel (%p563) target = $region88
      $region87: #{tpu_custom_call.1} parent=5 // pred_region
        %s567 = ssub.s32 %s30, 1
        // Predicated region
        $region89: #{tpu_custom_call.1} parent=87 // pred_check
          %p568 = pneg %p145
        $region90: #{tpu_custom_call.1} parent=87 // pred_check_branch
          %570 = sbr.rel (%p568) target = $region92
        $region91: #{tpu_custom_call.1} parent=87 // pred_region
          %571 = dma.done [#allocation3], 2048
        $region92: #{tpu_custom_call.1} parent=87 // pred_fallthru
          _
        // Predicated region
        $region93: #{tpu_custom_call.1} parent=87 // pred_check
          %p572 = pneg %p187
        $region94: #{tpu_custom_call.1} parent=87 // pred_check_branch
          %574 = sbr.rel (%p572) target = $region96
        $region95: #{tpu_custom_call.1} parent=87 // pred_region
          %575 = dma.done [#allocation6], 2048
        $region96: #{tpu_custom_call.1} parent=87 // pred_fallthru
          _
        // Predicated region
        $region97: #{tpu_custom_call.1} parent=87 // pred_check
          %p576 = pneg %p229
        $region98: #{tpu_custom_call.1} parent=87 // pred_check_branch
          %578 = sbr.rel (%p576) target = $region100
        $region99: #{tpu_custom_call.1} parent=87 // pred_region
          %579 = dma.done [#allocation6], 2048
        $region100: #{tpu_custom_call.1} parent=87 // pred_fallthru
          _
        // Predicated region
        $region101: #{tpu_custom_call.1} parent=87 // pred_check
          %p580 = pneg %p271
        $region102: #{tpu_custom_call.1} parent=87 // pred_check_branch
          %582 = sbr.rel (%p580) target = $region104
        $region103: #{tpu_custom_call.1} parent=87 // pred_region
          %583 = dma.done [#allocation9], 2048
        $region104: #{tpu_custom_call.1} parent=87 // pred_fallthru
          _
        // Predicated region
        $region105: #{tpu_custom_call.1} parent=87 // pred_check
          %p584 = pneg %p334
        $region106: #{tpu_custom_call.1} parent=87 // pred_check_branch
          %586 = sbr.rel (%p584) target = $region108
        $region107: #{tpu_custom_call.1} parent=87 // pred_region
          %587 = dma.done [#allocation9], 2048
        $region108: #{tpu_custom_call.1} parent=87 // pred_fallthru
          _
        // Predicated region
        $region109: #{tpu_custom_call.1} parent=87 // pred_check
          %p588 = pneg %p376
        $region110: #{tpu_custom_call.1} parent=87 // pred_check_branch
          %590 = sbr.rel (%p588) target = $region112
        $region111: #{tpu_custom_call.1} parent=87 // pred_region
          %591 = dma.done [#allocation12], 2048
        $region112: #{tpu_custom_call.1} parent=87 // pred_fallthru
          _
        %p592 = scmp.lt.s32.totalorder %s35, 1
        %s593 = scalar_select %p592, %s35, 1
        %s594 = smul.addr %s593, 8
        %s595 = scalar_lea.vmem %s0, %s594
        %p596 = pneg %p56
        %p597 = pneg %p53
        %p598 = scmp.lt.s32.totalorder %s35, 1
        %s599 = scalar_select %p598, %s35, 1
        %s600 = smul.addr %s599, 8
        %s601 = scalar_lea.vmem %s1, %s600
        %p602 = pneg %p82
        %p603 = pneg %p79
        %p604 = pneg %p103
        %p605 = pneg %p100
        %p606 = pneg %p124
        %p607 = pneg %p121
        %p608 = pneg %p145
        %p609 = pneg %p142
        %p610 = pneg %p166
        %p611 = pneg %p163
        %p612 = pneg %p187
        %p613 = pneg %p184
        %p614 = pneg %p208
        %p615 = pneg %p205
        %p616 = pneg %p229
        %p617 = pneg %p226
        %p618 = pneg %p250
        %p619 = pneg %p247
        %p620 = pneg %p271
        %p621 = pneg %p268
        %p622 = pneg %p292
        %p623 = pneg %p289
        %p624 = pneg %p313
        %p625 = pneg %p310
        %p626 = pneg %p334
        %p627 = pneg %p331
        %p628 = pneg %p355
        %p629 = pneg %p352
        %p630 = pneg %p376
        %p631 = pneg %p373
        %p632 = pneg %p397
        %p633 = pneg %p394
        %p634 = pneg %p423
        %p635 = pneg %p420
        %s636 = sand.u32 %s410, 1
        %s637 = scalar_lea.sflag [#allocation4], %s636
        %s638 = sand.u32 %s410, 1
        %s639 = smul.addr %s638, 8
        %s640 = scalar_lea.vmem [#allocation13], %s639
        %p641 = scmp.lt.s32.totalorder %s35, 1
        %s642 = scalar_select %p641, %s35, 1
        %s643 = smul.addr %s642, 8
        %s644 = scalar_lea.vmem %s0, %s643
        %p645 = scmp.lt.s32.totalorder %s35, 1
        %s646 = scalar_select %p645, %s35, 1
        %s647 = smul.addr %s646, 8
        %s648 = scalar_lea.vmem %s1, %s647
        %v649 = vld [vmem:[%s644] sm:$0xff]
        %v650 = vld [vmem:[%s2] sm:$0x3]
        %v651 = vld [vmem:[%s3] sm:$0x1]
        %v653 = vlaneseq
        %v654 = vshrl.u32 %v653, 7
        %v655 = vsub.s32 0, %v654
        %v656 = vrot.slane %v651, %v655
        %vm658 = vcmask 15360
        %v660 = vsel %vm658, %v649, 0
        %vm662 = vcmask 1041408
        %v664 = vsel %vm662, %v650, 0
        %666 = vmatprep.subr.mxu0 0.0
        %667 = vmatpush1.msra.mxu0 0.0
        %668 = vmatprep.subr.mxu0 0.0
        %669 = vmatpush1.msra.mxu0 0.0
        %670 = vmatprep.subr.mxu0 0.0
        %671 = vmatpush1.msra.mxu0 0.0
        %672 = vmatprep.subr.mxu0 0.0
        %673 = vmatpush1.msra.mxu0 0.0
        %674 = vmatprep.subr.mxu0 0.0
        %675 = vmatpush1.msra.mxu0 0.0
        %676 = vmatprep.subr.mxu0 0.0
        %677 = vmatpush1.msra.mxu0 0.0
        %678 = vmatprep.subr.mxu0 0.0
        %679 = vmatpush1.msra.mxu0 0.0
        %680 = vmatprep.subr.mxu0 0.0
        %681 = vmatpush1.msra.mxu0 0.0
        %682 = vmatprep.subr.mxu0 0.0
        %683 = vmatpush1.msra.mxu0 0.0
        %684 = vmatprep.subr.mxu0 0.0
        %685 = vmatpush1.msra.mxu0 0.0
        %686 = vmatprep.subr.mxu0 0.0
        %687 = vmatpush1.msra.mxu0 0.0
        %688 = vmatprep.subr.mxu0 0.0
        %689 = vmatpush1.msra.mxu0 0.0
        %690 = vmatprep.subr.mxu0 0.0
        %691 = vmatpush1.msra.mxu0 0.0
        %692 = vmatprep.subr.mxu0 0.0
        %693 = vmatpush1.msra.mxu0 0.0
        %694 = vmatprep.subr.mxu0 0.0
        %695 = vmatpush1.msra.mxu0 0.0
        %696 = vmatprep.subr.mxu0 0.0
        %697 = vmatpush1.msra.mxu0 %v664
        %698 = vmatprep.subr.mxu0 0.0
        %699 = vmatpush2.msra.mxu0 0.0
        %700 = vmatprep.subr.mxu0 0.0
        %701 = vmatpush2.msra.mxu0 0.0
        %702 = vmatprep.subr.mxu0 0.0
        %703 = vmatpush2.msra.mxu0 0.0
        %704 = vmatprep.subr.mxu0 0.0
        %705 = vmatpush2.msra.mxu0 0.0
        %706 = vmatprep.subr.mxu0 0.0
        %707 = vmatpush2.msra.mxu0 0.0
        %708 = vmatprep.subr.mxu0 0.0
        %709 = vmatpush2.msra.mxu0 0.0
        %710 = vmatprep.subr.mxu0 0.0
        %711 = vmatpush2.msra.mxu0 0.0
        %712 = vmatprep.subr.mxu0 0.0
        %713 = vmatpush2.msra.mxu0 0.0
        %714 = vmatprep.subr.mxu0 0.0
        %715 = vmatpush2.msra.mxu0 0.0
        %716 = vmatprep.subr.mxu0 0.0
        %717 = vmatpush2.msra.mxu0 0.0
        %718 = vmatprep.subr.mxu0 0.0
        %719 = vmatpush2.msra.mxu0 0.0
        %720 = vmatprep.subr.mxu0 0.0
        %721 = vmatpush2.msra.mxu0 0.0
        %722 = vmatprep.subr.mxu0 0.0
        %723 = vmatpush2.msra.mxu0 0.0
        %724 = vmatprep.subr.mxu0 0.0
        %725 = vmatpush2.msra.mxu0 0.0
        %726 = vmatprep.subr.mxu0 0.0
        %727 = vmatpush2.msra.mxu0 0.0
        %728 = vmatprep.subr.mxu0 0.0
        %729 = vmatpush2.msra.mxu0 0.0
        %730 = vmatprep.mubr.f32.mxu0 0.0
        %731 = vmatmul.mubr.f32.gmra.mxu0 %v660
        %v732 = vpop.f32.mrf.mxu0
        %v733 = vadd.f32 %v656, %v732
        %v734 = vpop.f32.mrf.mxu0
        %735 = vdwg.mxu0
        %v736 = vmax.f32 %v733, 0.0
        %v737 = vld [vmem:[#allocation2] sm:$0xff]
        %v738 = vld [vmem:[#allocation2 + $0x8] sm:$0xff]
        %v739 = vld [vmem:[#allocation2 + $0x10] sm:$0xff]
        %v740 = vld [vmem:[#allocation2 + $0x18] sm:$0xff]
        %v741 = vld [vmem:[#allocation2 + $0x20] sm:$0xff]
        %v742 = vld [vmem:[#allocation2 + $0x28] sm:$0xff]
        %v743 = vld [vmem:[#allocation2 + $0x30] sm:$0xff]
        %v744 = vld [vmem:[#allocation2 + $0x38] sm:$0xff]
        %v745 = vld [vmem:[#allocation2 + $0x40] sm:$0xff]
        %v746 = vld [vmem:[#allocation2 + $0x48] sm:$0xff]
        %v747 = vld [vmem:[#allocation2 + $0x50] sm:$0xff]
        %v748 = vld [vmem:[#allocation2 + $0x58] sm:$0xff]
        %v749 = vld [vmem:[#allocation2 + $0x60] sm:$0xff]
        %v750 = vld [vmem:[#allocation2 + $0x68] sm:$0xff]
        %v751 = vld [vmem:[#allocation2 + $0x70] sm:$0xff]
        %v752 = vld [vmem:[#allocation2 + $0x78] sm:$0xff]
        %v753 = vld [vmem:[%s5] sm:$0x1]
        %v755 = vlaneseq
        %v756 = vshrl.u32 %v755, 7
        %v757 = vsub.s32 0, %v756
        %v758 = vrot.slane %v753, %v757
        %760 = vmatprep.subr.mxu0 0.0
        %761 = vmatpush1.msra.mxu0 %v752
        %762 = vmatprep.subr.mxu0 0.0
        %763 = vmatpush1.msra.mxu0 %v751
        %764 = vmatprep.subr.mxu0 0.0
        %765 = vmatpush1.msra.mxu0 %v750
        %766 = vmatprep.subr.mxu0 0.0
        %767 = vmatpush1.msra.mxu0 %v749
        %768 = vmatprep.subr.mxu0 0.0
        %769 = vmatpush1.msra.mxu0 %v748
        %770 = vmatprep.subr.mxu0 0.0
        %771 = vmatpush1.msra.mxu0 %v747
        %772 = vmatprep.subr.mxu0 0.0
        %773 = vmatpush1.msra.mxu0 %v746
        %774 = vmatprep.subr.mxu0 0.0
        %775 = vmatpush1.msra.mxu0 %v745
        %776 = vmatprep.subr.mxu0 0.0
        %777 = vmatpush1.msra.mxu0 %v744
        %778 = vmatprep.subr.mxu0 0.0
        %779 = vmatpush1.msra.mxu0 %v743
        %780 = vmatprep.subr.mxu0 0.0
        %781 = vmatpush1.msra.mxu0 %v742
        %782 = vmatprep.subr.mxu0 0.0
        %783 = vmatpush1.msra.mxu0 %v741
        %784 = vmatprep.subr.mxu0 0.0
        %785 = vmatpush1.msra.mxu0 %v740
        %786 = vmatprep.subr.mxu0 0.0
        %787 = vmatpush1.msra.mxu0 %v739
        %788 = vmatprep.subr.mxu0 0.0
        %789 = vmatpush1.msra.mxu0 %v738
        %790 = vmatprep.subr.mxu0 0.0
        %791 = vmatpush1.msra.mxu0 %v737
        %792 = vmatprep.subr.mxu0 0.0
        %793 = vmatpush2.msra.mxu0 0.0
        %794 = vmatprep.subr.mxu0 0.0
        %795 = vmatpush2.msra.mxu0 0.0
        %796 = vmatprep.subr.mxu0 0.0
        %797 = vmatpush2.msra.mxu0 0.0
        %798 = vmatprep.subr.mxu0 0.0
        %799 = vmatpush2.msra.mxu0 0.0
        %800 = vmatprep.subr.mxu0 0.0
        %801 = vmatpush2.msra.mxu0 0.0
        %802 = vmatprep.subr.mxu0 0.0
        %803 = vmatpush2.msra.mxu0 0.0
        %804 = vmatprep.subr.mxu0 0.0
        %805 = vmatpush2.msra.mxu0 0.0
        %806 = vmatprep.subr.mxu0 0.0
        %807 = vmatpush2.msra.mxu0 0.0
        %808 = vmatprep.subr.mxu0 0.0
        %809 = vmatpush2.msra.mxu0 0.0
        %810 = vmatprep.subr.mxu0 0.0
        %811 = vmatpush2.msra.mxu0 0.0
        %812 = vmatprep.subr.mxu0 0.0
        %813 = vmatpush2.msra.mxu0 0.0
        %814 = vmatprep.subr.mxu0 0.0
        %815 = vmatpush2.msra.mxu0 0.0
        %816 = vmatprep.subr.mxu0 0.0
        %817 = vmatpush2.msra.mxu0 0.0
        %818 = vmatprep.subr.mxu0 0.0
        %819 = vmatpush2.msra.mxu0 0.0
        %820 = vmatprep.subr.mxu0 0.0
        %821 = vmatpush2.msra.mxu0 0.0
        %822 = vmatprep.subr.mxu0 0.0
        %823 = vmatpush2.msra.mxu0 0.0
        %824 = vmatprep.mubr.f32.mxu0 0.0
        %825 = vmatmul.mubr.f32.gmra.mxu0 %v736
        %v826 = vpop.f32.mrf.mxu0
        %v827 = vadd.f32 %v758, %v826
        %v828 = vpop.f32.mrf.mxu0
        %829 = vdwg.mxu0
        %v830 = vmax.f32 %v827, 0.0
        %v831 = vld [vmem:[#allocation5] sm:$0xff]
        %v832 = vld [vmem:[#allocation5 + $0x8] sm:$0xff]
        %v833 = vld [vmem:[#allocation5 + $0x10] sm:$0xff]
        %v834 = vld [vmem:[#allocation5 + $0x18] sm:$0xff]
        %v835 = vld [vmem:[#allocation5 + $0x20] sm:$0xff]
        %v836 = vld [vmem:[#allocation5 + $0x28] sm:$0xff]
        %v837 = vld [vmem:[#allocation5 + $0x30] sm:$0xff]
        %v838 = vld [vmem:[#allocation5 + $0x38] sm:$0xff]
        %v839 = vld [vmem:[#allocation5 + $0x40] sm:$0xff]
        %v840 = vld [vmem:[#allocation5 + $0x48] sm:$0xff]
        %v841 = vld [vmem:[#allocation5 + $0x50] sm:$0xff]
        %v842 = vld [vmem:[#allocation5 + $0x58] sm:$0xff]
        %v843 = vld [vmem:[#allocation5 + $0x60] sm:$0xff]
        %v844 = vld [vmem:[#allocation5 + $0x68] sm:$0xff]
        %v845 = vld [vmem:[#allocation5 + $0x70] sm:$0xff]
        %v846 = vld [vmem:[#allocation5 + $0x78] sm:$0xff]
        %v847 = vld [vmem:[%s7] sm:$0x1]
        %v849 = vlaneseq
        %v850 = vshrl.u32 %v849, 7
        %v851 = vsub.s32 0, %v850
        %v852 = vrot.slane %v847, %v851
        %854 = vmatprep.subr.mxu0 0.0
        %855 = vmatpush1.msra.mxu0 %v846
        %856 = vmatprep.subr.mxu0 0.0
        %857 = vmatpush1.msra.mxu0 %v845
        %858 = vmatprep.subr.mxu0 0.0
        %859 = vmatpush1.msra.mxu0 %v844
        %860 = vmatprep.subr.mxu0 0.0
        %861 = vmatpush1.msra.mxu0 %v843
        %862 = vmatprep.subr.mxu0 0.0
        %863 = vmatpush1.msra.mxu0 %v842
        %864 = vmatprep.subr.mxu0 0.0
        %865 = vmatpush1.msra.mxu0 %v841
        %866 = vmatprep.subr.mxu0 0.0
        %867 = vmatpush1.msra.mxu0 %v840
        %868 = vmatprep.subr.mxu0 0.0
        %869 = vmatpush1.msra.mxu0 %v839
        %870 = vmatprep.subr.mxu0 0.0
        %871 = vmatpush1.msra.mxu0 %v838
        %872 = vmatprep.subr.mxu0 0.0
        %873 = vmatpush1.msra.mxu0 %v837
        %874 = vmatprep.subr.mxu0 0.0
        %875 = vmatpush1.msra.mxu0 %v836
        %876 = vmatprep.subr.mxu0 0.0
        %877 = vmatpush1.msra.mxu0 %v835
        %878 = vmatprep.subr.mxu0 0.0
        %879 = vmatpush1.msra.mxu0 %v834
        %880 = vmatprep.subr.mxu0 0.0
        %881 = vmatpush1.msra.mxu0 %v833
        %882 = vmatprep.subr.mxu0 0.0
        %883 = vmatpush1.msra.mxu0 %v832
        %884 = vmatprep.subr.mxu0 0.0
        %885 = vmatpush1.msra.mxu0 %v831
        %886 = vmatprep.subr.mxu0 0.0
        %887 = vmatpush2.msra.mxu0 0.0
        %888 = vmatprep.subr.mxu0 0.0
        %889 = vmatpush2.msra.mxu0 0.0
        %890 = vmatprep.subr.mxu0 0.0
        %891 = vmatpush2.msra.mxu0 0.0
        %892 = vmatprep.subr.mxu0 0.0
        %893 = vmatpush2.msra.mxu0 0.0
        %894 = vmatprep.subr.mxu0 0.0
        %895 = vmatpush2.msra.mxu0 0.0
        %896 = vmatprep.subr.mxu0 0.0
        %897 = vmatpush2.msra.mxu0 0.0
        %898 = vmatprep.subr.mxu0 0.0
        %899 = vmatpush2.msra.mxu0 0.0
        %900 = vmatprep.subr.mxu0 0.0
        %901 = vmatpush2.msra.mxu0 0.0
        %902 = vmatprep.subr.mxu0 0.0
        %903 = vmatpush2.msra.mxu0 0.0
        %904 = vmatprep.subr.mxu0 0.0
        %905 = vmatpush2.msra.mxu0 0.0
        %906 = vmatprep.subr.mxu0 0.0
        %907 = vmatpush2.msra.mxu0 0.0
        %908 = vmatprep.subr.mxu0 0.0
        %909 = vmatpush2.msra.mxu0 0.0
        %910 = vmatprep.subr.mxu0 0.0
        %911 = vmatpush2.msra.mxu0 0.0
        %912 = vmatprep.subr.mxu0 0.0
        %913 = vmatpush2.msra.mxu0 0.0
        %914 = vmatprep.subr.mxu0 0.0
        %915 = vmatpush2.msra.mxu0 0.0
        %916 = vmatprep.subr.mxu0 0.0
        %917 = vmatpush2.msra.mxu0 0.0
        %918 = vmatprep.mubr.f32.mxu0 0.0
        %919 = vmatmul.mubr.f32.gmra.mxu0 %v830
        %v920 = vpop.f32.mrf.mxu0
        %v921 = vadd.f32 %v852, %v920
        %v922 = vpop.f32.mrf.mxu0
        %923 = vdwg.mxu0
        %v924 = vmax.f32 %v921, 0.0
        %v925 = vld [vmem:[#allocation7] sm:$0xff]
        %v926 = vld [vmem:[#allocation7 + $0x8] sm:$0xff]
        %v927 = vld [vmem:[#allocation7 + $0x10] sm:$0xff]
        %v928 = vld [vmem:[#allocation7 + $0x18] sm:$0xff]
        %v929 = vld [vmem:[#allocation7 + $0x20] sm:$0xff]
        %v930 = vld [vmem:[#allocation7 + $0x28] sm:$0xff]
        %v931 = vld [vmem:[#allocation7 + $0x30] sm:$0xff]
        %v932 = vld [vmem:[#allocation7 + $0x38] sm:$0xff]
        %v933 = vld [vmem:[#allocation7 + $0x40] sm:$0xff]
        %v934 = vld [vmem:[#allocation7 + $0x48] sm:$0xff]
        %v935 = vld [vmem:[#allocation7 + $0x50] sm:$0xff]
        %v936 = vld [vmem:[#allocation7 + $0x58] sm:$0xff]
        %v937 = vld [vmem:[#allocation7 + $0x60] sm:$0xff]
        %v938 = vld [vmem:[#allocation7 + $0x68] sm:$0xff]
        %v939 = vld [vmem:[#allocation7 + $0x70] sm:$0xff]
        %v940 = vld [vmem:[#allocation7 + $0x78] sm:$0xff]
        %v941 = vld [vmem:[%s9] sm:$0x1]
        %v943 = vlaneseq
        %v944 = vshrl.u32 %v943, 7
        %v945 = vsub.s32 0, %v944
        %v946 = vrot.slane %v941, %v945
        %948 = vmatprep.subr.mxu0 0.0
        %949 = vmatpush1.msra.mxu0 %v940
        %950 = vmatprep.subr.mxu0 0.0
        %951 = vmatpush1.msra.mxu0 %v939
        %952 = vmatprep.subr.mxu0 0.0
        %953 = vmatpush1.msra.mxu0 %v938
        %954 = vmatprep.subr.mxu0 0.0
        %955 = vmatpush1.msra.mxu0 %v937
        %956 = vmatprep.subr.mxu0 0.0
        %957 = vmatpush1.msra.mxu0 %v936
        %958 = vmatprep.subr.mxu0 0.0
        %959 = vmatpush1.msra.mxu0 %v935
        %960 = vmatprep.subr.mxu0 0.0
        %961 = vmatpush1.msra.mxu0 %v934
        %962 = vmatprep.subr.mxu0 0.0
        %963 = vmatpush1.msra.mxu0 %v933
        %964 = vmatprep.subr.mxu0 0.0
        %965 = vmatpush1.msra.mxu0 %v932
        %966 = vmatprep.subr.mxu0 0.0
        %967 = vmatpush1.msra.mxu0 %v931
        %968 = vmatprep.subr.mxu0 0.0
        %969 = vmatpush1.msra.mxu0 %v930
        %970 = vmatprep.subr.mxu0 0.0
        %971 = vmatpush1.msra.mxu0 %v929
        %972 = vmatprep.subr.mxu0 0.0
        %973 = vmatpush1.msra.mxu0 %v928
        %974 = vmatprep.subr.mxu0 0.0
        %975 = vmatpush1.msra.mxu0 %v927
        %976 = vmatprep.subr.mxu0 0.0
        %977 = vmatpush1.msra.mxu0 %v926
        %978 = vmatprep.subr.mxu0 0.0
        %979 = vmatpush1.msra.mxu0 %v925
        %980 = vmatprep.subr.mxu0 0.0
        %981 = vmatpush2.msra.mxu0 0.0
        %982 = vmatprep.subr.mxu0 0.0
        %983 = vmatpush2.msra.mxu0 0.0
        %984 = vmatprep.subr.mxu0 0.0
        %985 = vmatpush2.msra.mxu0 0.0
        %986 = vmatprep.subr.mxu0 0.0
        %987 = vmatpush2.msra.mxu0 0.0
        %988 = vmatprep.subr.mxu0 0.0
        %989 = vmatpush2.msra.mxu0 0.0
        %990 = vmatprep.subr.mxu0 0.0
        %991 = vmatpush2.msra.mxu0 0.0
        %992 = vmatprep.subr.mxu0 0.0
        %993 = vmatpush2.msra.mxu0 0.0
        %994 = vmatprep.subr.mxu0 0.0
        %995 = vmatpush2.msra.mxu0 0.0
        %996 = vmatprep.subr.mxu0 0.0
        %997 = vmatpush2.msra.mxu0 0.0
        %998 = vmatprep.subr.mxu0 0.0
        %999 = vmatpush2.msra.mxu0 0.0
        %1000 = vmatprep.subr.mxu0 0.0
        %1001 = vmatpush2.msra.mxu0 0.0
        %1002 = vmatprep.subr.mxu0 0.0
        %1003 = vmatpush2.msra.mxu0 0.0
        %1004 = vmatprep.subr.mxu0 0.0
        %1005 = vmatpush2.msra.mxu0 0.0
        %1006 = vmatprep.subr.mxu0 0.0
        %1007 = vmatpush2.msra.mxu0 0.0
        %1008 = vmatprep.subr.mxu0 0.0
        %1009 = vmatpush2.msra.mxu0 0.0
        %1010 = vmatprep.subr.mxu0 0.0
        %1011 = vmatpush2.msra.mxu0 0.0
        %1012 = vmatprep.mubr.f32.mxu0 0.0
        %1013 = vmatmul.mubr.f32.gmra.mxu0 %v924
        %v1014 = vpop.f32.mrf.mxu0
        %v1015 = vadd.f32 %v946, %v1014
        %v1016 = vpop.f32.mrf.mxu0
        %1017 = vdwg.mxu0
        %v1018 = vrot.slane %v1015, 4
        %v1019 = vadd.f32 %v1015, %v1018
        %v1020 = vrot.slane %v1019, 2
        %v1021 = vadd.f32 %v1019, %v1020
        %v1022 = vrot.slane %v1021, 1
        %v1023 = vadd.f32 %v1021, %v1022
        %v1024 = vmul.f32 %v1023, 0.125
        %v1025 = vld [vmem:[%s648] sm:$0xff]
        %v1026 = vld [vmem:[#allocation8] sm:$0xff]
        %v1027 = vld [vmem:[#allocation8 + $0x8] sm:$0xff]
        %v1028 = vld [vmem:[#allocation8 + $0x10] sm:$0xff]
        %v1029 = vld [vmem:[#allocation8 + $0x18] sm:$0xff]
        %v1030 = vld [vmem:[#allocation8 + $0x20] sm:$0xff]
        %v1031 = vld [vmem:[#allocation8 + $0x28] sm:$0xff]
        %v1032 = vld [vmem:[#allocation8 + $0x30] sm:$0xff]
        %v1033 = vld [vmem:[#allocation8 + $0x38] sm:$0xff]
        %v1034 = vld [vmem:[#allocation8 + $0x40] sm:$0xff]
        %v1035 = vld [vmem:[#allocation8 + $0x48] sm:$0xff]
        %v1036 = vld [vmem:[#allocation8 + $0x50] sm:$0xff]
        %v1037 = vld [vmem:[#allocation8 + $0x58] sm:$0xff]
        %v1038 = vld [vmem:[#allocation8 + $0x60] sm:$0xff]
        %v1039 = vld [vmem:[#allocation8 + $0x68] sm:$0xff]
        %v1040 = vld [vmem:[#allocation8 + $0x70] sm:$0xff]
        %v1041 = vld [vmem:[#allocation8 + $0x78] sm:$0xff]
        %v1042 = vld [vmem:[%s12] sm:$0x1]
        %1043 = vmatprep.subr.mxu0 0.0
        %1044 = vmatpush1.msra.mxu0 %v1041
        %1045 = vmatprep.subr.mxu0 0.0
        %1046 = vmatpush1.msra.mxu0 %v1040
        %1047 = vmatprep.subr.mxu0 0.0
        %1048 = vmatpush1.msra.mxu0 %v1039
        %1049 = vmatprep.subr.mxu0 0.0
        %1050 = vmatpush1.msra.mxu0 %v1038
        %1051 = vmatprep.subr.mxu0 0.0
        %1052 = vmatpush1.msra.mxu0 %v1037
        %1053 = vmatprep.subr.mxu0 0.0
        %1054 = vmatpush1.msra.mxu0 %v1036
        %1055 = vmatprep.subr.mxu0 0.0
        %1056 = vmatpush1.msra.mxu0 %v1035
        %1057 = vmatprep.subr.mxu0 0.0
        %1058 = vmatpush1.msra.mxu0 %v1034
        %1059 = vmatprep.subr.mxu0 0.0
        %1060 = vmatpush1.msra.mxu0 %v1033
        %1061 = vmatprep.subr.mxu0 0.0
        %1062 = vmatpush1.msra.mxu0 %v1032
        %1063 = vmatprep.subr.mxu0 0.0
        %1064 = vmatpush1.msra.mxu0 %v1031
        %1065 = vmatprep.subr.mxu0 0.0
        %1066 = vmatpush1.msra.mxu0 %v1030
        %1067 = vmatprep.subr.mxu0 0.0
        %1068 = vmatpush1.msra.mxu0 %v1029
        %1069 = vmatprep.subr.mxu0 0.0
        %1070 = vmatpush1.msra.mxu0 %v1028
        %1071 = vmatprep.subr.mxu0 0.0
        %1072 = vmatpush1.msra.mxu0 %v1027
        %1073 = vmatprep.subr.mxu0 0.0
        %1074 = vmatpush1.msra.mxu0 %v1026
        %1075 = vmatprep.subr.mxu0 0.0
        %1076 = vmatpush2.msra.mxu0 0.0
        %1077 = vmatprep.subr.mxu0 0.0
        %1078 = vmatpush2.msra.mxu0 0.0
        %1079 = vmatprep.subr.mxu0 0.0
        %1080 = vmatpush2.msra.mxu0 0.0
        %1081 = vmatprep.subr.mxu0 0.0
        %1082 = vmatpush2.msra.mxu0 0.0
        %1083 = vmatprep.subr.mxu0 0.0
        %1084 = vmatpush2.msra.mxu0 0.0
        %1085 = vmatprep.subr.mxu0 0.0
        %1086 = vmatpush2.msra.mxu0 0.0
        %1087 = vmatprep.subr.mxu0 0.0
        %1088 = vmatpush2.msra.mxu0 0.0
        %1089 = vmatprep.subr.mxu0 0.0
        %1090 = vmatpush2.msra.mxu0 0.0
        %1091 = vmatprep.subr.mxu0 0.0
        %1092 = vmatpush2.msra.mxu0 0.0
        %1093 = vmatprep.subr.mxu0 0.0
        %1094 = vmatpush2.msra.mxu0 0.0
        %1095 = vmatprep.subr.mxu0 0.0
        %1096 = vmatpush2.msra.mxu0 0.0
        %1097 = vmatprep.subr.mxu0 0.0
        %1098 = vmatpush2.msra.mxu0 0.0
        %1099 = vmatprep.subr.mxu0 0.0
        %1100 = vmatpush2.msra.mxu0 0.0
        %1101 = vmatprep.subr.mxu0 0.0
        %1102 = vmatpush2.msra.mxu0 0.0
        %1103 = vmatprep.subr.mxu0 0.0
        %1104 = vmatpush2.msra.mxu0 0.0
        %1105 = vmatprep.subr.mxu0 0.0
        %1106 = vmatpush2.msra.mxu0 0.0
        %1107 = vmatprep.mubr.f32.mxu0 0.0
        %1108 = vmatmul.mubr.f32.gmra.mxu0 %v1024
        %v1109 = vpop.f32.mrf.mxu0
        %v1110 = vadd.f32 %v1042, %v1109
        %v1111 = vpop.f32.mrf.mxu0
        %1112 = vdwg.mxu0
        %v1113 = vld [vmem:[%s11] sm:$0x1]
        %vm1114 = vcmask 7168
        %v1116 = vsel %vm1114, %v1025, 0
        %vm1118 = vcmask 1040384
        %v1120 = vsel %vm1118, %v1113, 0
        %1122 = vmatprep.subr.mxu0 0.0
        %1123 = vmatpush1.msra.mxu0 0.0
        %1124 = vmatprep.subr.mxu0 0.0
        %1125 = vmatpush1.msra.mxu0 0.0
        %1126 = vmatprep.subr.mxu0 0.0
        %1127 = vmatpush1.msra.mxu0 0.0
        %1128 = vmatprep.subr.mxu0 0.0
        %1129 = vmatpush1.msra.mxu0 0.0
        %1130 = vmatprep.subr.mxu0 0.0
        %1131 = vmatpush1.msra.mxu0 0.0
        %1132 = vmatprep.subr.mxu0 0.0
        %1133 = vmatpush1.msra.mxu0 0.0
        %1134 = vmatprep.subr.mxu0 0.0
        %1135 = vmatpush1.msra.mxu0 0.0
        %1136 = vmatprep.subr.mxu0 0.0
        %1137 = vmatpush1.msra.mxu0 0.0
        %1138 = vmatprep.subr.mxu0 0.0
        %1139 = vmatpush1.msra.mxu0 0.0
        %1140 = vmatprep.subr.mxu0 0.0
        %1141 = vmatpush1.msra.mxu0 0.0
        %1142 = vmatprep.subr.mxu0 0.0
        %1143 = vmatpush1.msra.mxu0 0.0
        %1144 = vmatprep.subr.mxu0 0.0
        %1145 = vmatpush1.msra.mxu0 0.0
        %1146 = vmatprep.subr.mxu0 0.0
        %1147 = vmatpush1.msra.mxu0 0.0
        %1148 = vmatprep.subr.mxu0 0.0
        %1149 = vmatpush1.msra.mxu0 0.0
        %1150 = vmatprep.subr.mxu0 0.0
        %1151 = vmatpush1.msra.mxu0 0.0
        %1152 = vmatprep.subr.mxu0 0.0
        %1153 = vmatpush1.msra.mxu0 %v1120
        %1154 = vmatprep.subr.mxu0 0.0
        %1155 = vmatpush2.msra.mxu0 0.0
        %1156 = vmatprep.subr.mxu0 0.0
        %1157 = vmatpush2.msra.mxu0 0.0
        %1158 = vmatprep.subr.mxu0 0.0
        %1159 = vmatpush2.msra.mxu0 0.0
        %1160 = vmatprep.subr.mxu0 0.0
        %1161 = vmatpush2.msra.mxu0 0.0
        %1162 = vmatprep.subr.mxu0 0.0
        %1163 = vmatpush2.msra.mxu0 0.0
        %1164 = vmatprep.subr.mxu0 0.0
        %1165 = vmatpush2.msra.mxu0 0.0
        %1166 = vmatprep.subr.mxu0 0.0
        %1167 = vmatpush2.msra.mxu0 0.0
        %1168 = vmatprep.subr.mxu0 0.0
        %1169 = vmatpush2.msra.mxu0 0.0
        %1170 = vmatprep.subr.mxu0 0.0
        %1171 = vmatpush2.msra.mxu0 0.0
        %1172 = vmatprep.subr.mxu0 0.0
        %1173 = vmatpush2.msra.mxu0 0.0
        %1174 = vmatprep.subr.mxu0 0.0
        %1175 = vmatpush2.msra.mxu0 0.0
        %1176 = vmatprep.subr.mxu0 0.0
        %1177 = vmatpush2.msra.mxu0 0.0
        %1178 = vmatprep.subr.mxu0 0.0
        %1179 = vmatpush2.msra.mxu0 0.0
        %1180 = vmatprep.subr.mxu0 0.0
        %1181 = vmatpush2.msra.mxu0 0.0
        %1182 = vmatprep.subr.mxu0 0.0
        %1183 = vmatpush2.msra.mxu0 0.0
        %1184 = vmatprep.subr.mxu0 0.0
        %1185 = vmatpush2.msra.mxu0 0.0
        %1186 = vmatprep.mubr.f32.mxu0 0.0
        %1187 = vmatmul.mubr.f32.gmra.mxu0 %v1116
        %v1188 = vpop.f32.mrf.mxu0
        %v1189 = vadd.f32 0.0, %v1188
        %v1190 = vpop.f32.mrf.mxu0
        %1191 = vdwg.mxu0
        %v1192 = vlaneseq
        %v1193 = vshrl.u32 %v1192, 7
        %v1194 = vsub.s32 0, %v1193
        %v1195 = vrot.slane %v1110, %v1194
        %v1196 = vadd.f32 %v1189, %v1195
        %v1197 = vmax.f32 %v1196, 0.0
        %v1198 = vld [vmem:[#allocation10] sm:$0xff]
        %v1199 = vld [vmem:[#allocation10 + $0x8] sm:$0xff]
        %v1200 = vld [vmem:[#allocation10 + $0x10] sm:$0xff]
        %v1201 = vld [vmem:[#allocation10 + $0x18] sm:$0xff]
        %v1202 = vld [vmem:[#allocation10 + $0x20] sm:$0xff]
        %v1203 = vld [vmem:[#allocation10 + $0x28] sm:$0xff]
        %v1204 = vld [vmem:[#allocation10 + $0x30] sm:$0xff]
        %v1205 = vld [vmem:[#allocation10 + $0x38] sm:$0xff]
        %v1206 = vld [vmem:[#allocation10 + $0x40] sm:$0xff]
        %v1207 = vld [vmem:[#allocation10 + $0x48] sm:$0xff]
        %v1208 = vld [vmem:[#allocation10 + $0x50] sm:$0xff]
        %v1209 = vld [vmem:[#allocation10 + $0x58] sm:$0xff]
        %v1210 = vld [vmem:[#allocation10 + $0x60] sm:$0xff]
        %v1211 = vld [vmem:[#allocation10 + $0x68] sm:$0xff]
        %v1212 = vld [vmem:[#allocation10 + $0x70] sm:$0xff]
        %v1213 = vld [vmem:[#allocation10 + $0x78] sm:$0xff]
        %v1214 = vld [vmem:[%s14] sm:$0x1]
        %v1216 = vlaneseq
        %v1217 = vshrl.u32 %v1216, 7
        %v1218 = vsub.s32 0, %v1217
        %v1219 = vrot.slane %v1214, %v1218
        %1221 = vmatprep.subr.mxu0 0.0
        %1222 = vmatpush1.msra.mxu0 %v1213
        %1223 = vmatprep.subr.mxu0 0.0
        %1224 = vmatpush1.msra.mxu0 %v1212
        %1225 = vmatprep.subr.mxu0 0.0
        %1226 = vmatpush1.msra.mxu0 %v1211
        %1227 = vmatprep.subr.mxu0 0.0
        %1228 = vmatpush1.msra.mxu0 %v1210
        %1229 = vmatprep.subr.mxu0 0.0
        %1230 = vmatpush1.msra.mxu0 %v1209
        %1231 = vmatprep.subr.mxu0 0.0
        %1232 = vmatpush1.msra.mxu0 %v1208
        %1233 = vmatprep.subr.mxu0 0.0
        %1234 = vmatpush1.msra.mxu0 %v1207
        %1235 = vmatprep.subr.mxu0 0.0
        %1236 = vmatpush1.msra.mxu0 %v1206
        %1237 = vmatprep.subr.mxu0 0.0
        %1238 = vmatpush1.msra.mxu0 %v1205
        %1239 = vmatprep.subr.mxu0 0.0
        %1240 = vmatpush1.msra.mxu0 %v1204
        %1241 = vmatprep.subr.mxu0 0.0
        %1242 = vmatpush1.msra.mxu0 %v1203
        %1243 = vmatprep.subr.mxu0 0.0
        %1244 = vmatpush1.msra.mxu0 %v1202
        %1245 = vmatprep.subr.mxu0 0.0
        %1246 = vmatpush1.msra.mxu0 %v1201
        %1247 = vmatprep.subr.mxu0 0.0
        %1248 = vmatpush1.msra.mxu0 %v1200
        %1249 = vmatprep.subr.mxu0 0.0
        %1250 = vmatpush1.msra.mxu0 %v1199
        %1251 = vmatprep.subr.mxu0 0.0
        %1252 = vmatpush1.msra.mxu0 %v1198
        %1253 = vmatprep.subr.mxu0 0.0
        %1254 = vmatpush2.msra.mxu0 0.0
        %1255 = vmatprep.subr.mxu0 0.0
        %1256 = vmatpush2.msra.mxu0 0.0
        %1257 = vmatprep.subr.mxu0 0.0
        %1258 = vmatpush2.msra.mxu0 0.0
        %1259 = vmatprep.subr.mxu0 0.0
        %1260 = vmatpush2.msra.mxu0 0.0
        %1261 = vmatprep.subr.mxu0 0.0
        %1262 = vmatpush2.msra.mxu0 0.0
        %1263 = vmatprep.subr.mxu0 0.0
        %1264 = vmatpush2.msra.mxu0 0.0
        %1265 = vmatprep.subr.mxu0 0.0
        %1266 = vmatpush2.msra.mxu0 0.0
        %1267 = vmatprep.subr.mxu0 0.0
        %1268 = vmatpush2.msra.mxu0 0.0
        %1269 = vmatprep.subr.mxu0 0.0
        %1270 = vmatpush2.msra.mxu0 0.0
        %1271 = vmatprep.subr.mxu0 0.0
        %1272 = vmatpush2.msra.mxu0 0.0
        %1273 = vmatprep.subr.mxu0 0.0
        %1274 = vmatpush2.msra.mxu0 0.0
        %1275 = vmatprep.subr.mxu0 0.0
        %1276 = vmatpush2.msra.mxu0 0.0
        %1277 = vmatprep.subr.mxu0 0.0
        %1278 = vmatpush2.msra.mxu0 0.0
        %1279 = vmatprep.subr.mxu0 0.0
        %1280 = vmatpush2.msra.mxu0 0.0
        %1281 = vmatprep.subr.mxu0 0.0
        %1282 = vmatpush2.msra.mxu0 0.0
        %1283 = vmatprep.subr.mxu0 0.0
        %1284 = vmatpush2.msra.mxu0 0.0
        %1285 = vmatprep.mubr.f32.mxu0 0.0
        %1286 = vmatmul.mubr.f32.gmra.mxu0 %v1197
        %v1287 = vpop.f32.mrf.mxu0
        %v1288 = vadd.f32 %v1219, %v1287
        %v1289 = vpop.f32.mrf.mxu0
        %1290 = vdwg.mxu0
        %v1291 = vmax.f32 %v1288, 0.0
        %v1292 = vld [vmem:[#allocation11] sm:$0xff]
        %v1293 = vld [vmem:[#allocation11 + $0x8] sm:$0xff]
        %v1294 = vld [vmem:[#allocation11 + $0x10] sm:$0xff]
        %v1295 = vld [vmem:[#allocation11 + $0x18] sm:$0xff]
        %v1296 = vld [vmem:[#allocation11 + $0x20] sm:$0xff]
        %v1297 = vld [vmem:[#allocation11 + $0x28] sm:$0xff]
        %v1298 = vld [vmem:[#allocation11 + $0x30] sm:$0xff]
        %v1299 = vld [vmem:[#allocation11 + $0x38] sm:$0xff]
        %v1300 = vld [vmem:[#allocation11 + $0x40] sm:$0xff]
        %v1301 = vld [vmem:[#allocation11 + $0x48] sm:$0xff]
        %v1302 = vld [vmem:[#allocation11 + $0x50] sm:$0xff]
        %v1303 = vld [vmem:[#allocation11 + $0x58] sm:$0xff]
        %v1304 = vld [vmem:[#allocation11 + $0x60] sm:$0xff]
        %v1305 = vld [vmem:[#allocation11 + $0x68] sm:$0xff]
        %v1306 = vld [vmem:[#allocation11 + $0x70] sm:$0xff]
        %v1307 = vld [vmem:[#allocation11 + $0x78] sm:$0xff]
        %v1308 = vld [vmem:[%s16] sm:$0x1]
        %v1310 = vlaneseq
        %v1311 = vshrl.u32 %v1310, 7
        %v1312 = vsub.s32 0, %v1311
        %v1313 = vrot.slane %v1308, %v1312
        %1315 = vmatprep.subr.mxu0 0.0
        %1316 = vmatpush1.msra.mxu0 %v1307
        %1317 = vmatprep.subr.mxu0 0.0
        %1318 = vmatpush1.msra.mxu0 %v1306
        %1319 = vmatprep.subr.mxu0 0.0
        %1320 = vmatpush1.msra.mxu0 %v1305
        %1321 = vmatprep.subr.mxu0 0.0
        %1322 = vmatpush1.msra.mxu0 %v1304
        %1323 = vmatprep.subr.mxu0 0.0
        %1324 = vmatpush1.msra.mxu0 %v1303
        %1325 = vmatprep.subr.mxu0 0.0
        %1326 = vmatpush1.msra.mxu0 %v1302
        %1327 = vmatprep.subr.mxu0 0.0
        %1328 = vmatpush1.msra.mxu0 %v1301
        %1329 = vmatprep.subr.mxu0 0.0
        %1330 = vmatpush1.msra.mxu0 %v1300
        %1331 = vmatprep.subr.mxu0 0.0
        %1332 = vmatpush1.msra.mxu0 %v1299
        %1333 = vmatprep.subr.mxu0 0.0
        %1334 = vmatpush1.msra.mxu0 %v1298
        %1335 = vmatprep.subr.mxu0 0.0
        %1336 = vmatpush1.msra.mxu0 %v1297
        %1337 = vmatprep.subr.mxu0 0.0
        %1338 = vmatpush1.msra.mxu0 %v1296
        %1339 = vmatprep.subr.mxu0 0.0
        %1340 = vmatpush1.msra.mxu0 %v1295
        %1341 = vmatprep.subr.mxu0 0.0
        %1342 = vmatpush1.msra.mxu0 %v1294
        %1343 = vmatprep.subr.mxu0 0.0
        %1344 = vmatpush1.msra.mxu0 %v1293
        %1345 = vmatprep.subr.mxu0 0.0
        %1346 = vmatpush1.msra.mxu0 %v1292
        %1347 = vmatprep.subr.mxu0 0.0
        %1348 = vmatpush2.msra.mxu0 0.0
        %1349 = vmatprep.subr.mxu0 0.0
        %1350 = vmatpush2.msra.mxu0 0.0
        %1351 = vmatprep.subr.mxu0 0.0
        %1352 = vmatpush2.msra.mxu0 0.0
        %1353 = vmatprep.subr.mxu0 0.0
        %1354 = vmatpush2.msra.mxu0 0.0
        %1355 = vmatprep.subr.mxu0 0.0
        %1356 = vmatpush2.msra.mxu0 0.0
        %1357 = vmatprep.subr.mxu0 0.0
        %1358 = vmatpush2.msra.mxu0 0.0
        %1359 = vmatprep.subr.mxu0 0.0
        %1360 = vmatpush2.msra.mxu0 0.0
        %1361 = vmatprep.subr.mxu0 0.0
        %1362 = vmatpush2.msra.mxu0 0.0
        %1363 = vmatprep.subr.mxu0 0.0
        %1364 = vmatpush2.msra.mxu0 0.0
        %1365 = vmatprep.subr.mxu0 0.0
        %1366 = vmatpush2.msra.mxu0 0.0
        %1367 = vmatprep.subr.mxu0 0.0
        %1368 = vmatpush2.msra.mxu0 0.0
        %1369 = vmatprep.subr.mxu0 0.0
        %1370 = vmatpush2.msra.mxu0 0.0
        %1371 = vmatprep.subr.mxu0 0.0
        %1372 = vmatpush2.msra.mxu0 0.0
        %1373 = vmatprep.subr.mxu0 0.0
        %1374 = vmatpush2.msra.mxu0 0.0
        %1375 = vmatprep.subr.mxu0 0.0
        %1376 = vmatpush2.msra.mxu0 0.0
        %1377 = vmatprep.subr.mxu0 0.0
        %1378 = vmatpush2.msra.mxu0 0.0
        %1379 = vmatprep.mubr.f32.mxu0 0.0
        %1380 = vmatmul.mubr.f32.gmra.mxu0 %v1291
        %v1381 = vpop.f32.mrf.mxu0
        %v1382 = vadd.f32 %v1313, %v1381
        %v1383 = vpop.f32.mrf.mxu0
        %1384 = vdwg.mxu0
        %1385 = vst [vmem:[%s640] sm:$0xff] %v1382
        %s1386 = sand.u32 %s410, 1
        %s1387 = scalar_lea.sflag [#allocation4], %s1386
        %s1388 = sand.u32 %s410, 1
        %s1389 = smul.addr %s1388, 8
        %s1390 = scalar_lea.vmem [#allocation13], %s1389
        // Predicated region
        $region113: #{tpu_custom_call.1} parent=87 // pred_check
          %p1391 = pneg %p420
        $region114: #{tpu_custom_call.1} parent=87 // pred_check_branch
          %1393 = sbr.rel (%p1391) target = $region116
        $region115: #{tpu_custom_call.1} parent=87 // pred_region
          %s1395 = ssub.s32 128, 128
          %1396 = vsyncadd %s1387, %s1395
          %s1397 = smul.addr %s35, 128
          %s1398 = scalar_lea.hbm %s17, %s1397
          %s1400 = sshll.u32 %s1390, 4
          %s1401 = int_to_ptr.vmem [resolvable:$true] %s1400
          %1403 = dma.vmem_to_hbm [thread:$0]  %s1401, 128, %s1398, %s1387
        $region116: #{tpu_custom_call.1} parent=87 // pred_fallthru
          _
      $region88: #{tpu_custom_call.1} parent=5 // pred_fallthru
        _
      %p1404 = scmp.le.s32.totalorder 2, %s30
      // Predicated region
      $region117: #{tpu_custom_call.1} parent=5 // pred_check
        %p1405 = pneg %p1404
      $region118: #{tpu_custom_call.1} parent=5 // pred_check_branch
        %1407 = sbr.rel (%p1405) target = $region120
      $region119: #{tpu_custom_call.1} parent=5 // pred_region
        %s1408 = ssub.s32 %s30, 2
        // Predicated region
        $region121: #{tpu_custom_call.1} parent=119 // pred_check
          %p1409 = pneg %p426
        $region122: #{tpu_custom_call.1} parent=119 // pred_check_branch
          %1411 = sbr.rel (%p1409) target = $region124
        $region123: #{tpu_custom_call.1} parent=119 // pred_region
          %s1412 = sand.u32 %s411, 1
          %s1413 = scalar_lea.sflag [#allocation4], %s1412
          %s1414 = sand.u32 %s411, 1
          %s1415 = smul.addr %s1414, 8
          %s1416 = scalar_lea.vmem [#allocation13], %s1415
          %1417 = dma.done %s1413, 128
        $region124: #{tpu_custom_call.1} parent=119 // pred_fallthru
          _
      $region120: #{tpu_custom_call.1} parent=5 // pred_fallthru
        _
    $region6: #{tpu_custom_call.1} parent=1 // loop_footer
      %s34 = sadd.s32 1, %s30
    $region7: #{tpu_custom_call.1} parent=1 // loop_footer_branch
      %29 = sbr.rel target = $region3
    $region8: #{tpu_custom_call.1} parent=1 // loop_exit
      _
    %1418 = vsyncpa [#allocation3], 1
    %s1419 = scalar_lea.sflag [#allocation3], 1
    %1420 = vsyncpa %s1419, 1
    %1421 = vsyncpa [#allocation6], 1
    %1422 = vsyncpa [#allocation9], 1
    %1423 = vsyncpa [#allocation12], 1
    %1424 = vsyncpa [#allocation4], 1
    %s1425 = scalar_lea.sflag [#allocation4], 1
    %1426 = vsyncpa %s1425, 1

</llo_original>
